<compile_context>
chip_gen: v6e
topology: v6e:2x2x1
jax: 0.10.0
libtpu: 0.0.40
codegen_flags: <defaults>
</compile_context>

<pallas_src>
import numpy as np
import jax
import jax.numpy as jnp
from jax import lax
from jax.experimental import pallas as pl
from jax.experimental.pallas import tpu as pltpu


def _round_up(x, m):
    return ((x + m - 1) // m) * m


# --------------------------------------------------------------------------- #
# Trace-time constant folding (all tiny: <400 KB total, cast to bf16).
# --------------------------------------------------------------------------- #

def _conv1_mat(w1):
    """w1: (6,1,3,3) torch layout -> M1 (84, 256).

    M1[ky*28 + j, pw*128 + n*6 + co] = w1[co, 0, ky, kx]  with  j = 2n+pw+kx-1
    (columns 84..127 / 212..255 stay zero).  Contracting the (28, tb, 84) LHS
    built from input rows h-1, h, h+1 gives conv1 output for row h, with output
    columns ordered so 2x2 pooling = row-pair max + 128-aligned lane-half max.
    """
    rows, cols, cos, kys, kxs = [], [], [], [], []
    for ky in range(3):
        for n in range(14):
            for pw in range(2):
                w = 2 * n + pw
                for kx in range(3):
                    j = w + kx - 1
                    if 0 <= j < 28:
                        for co in range(6):
                            rows.append(ky * 28 + j)
                            cols.append(pw * 128 + n * 6 + co)
                            cos.append(co); kys.append(ky); kxs.append(kx)
    vals = w1[jnp.array(cos), 0, jnp.array(kys), jnp.array(kxs)]
    m = jnp.zeros((84, 256), jnp.float32)
    return m.at[jnp.array(rows), jnp.array(cols)].set(vals)


def _conv2_mat(w2):
    """w2: (10,6,3,3) torch layout -> M2 (384, 256).

    M2[ky*128 + n*6 + ci, pw*128 + v*10 + co] = w2[co, ci, ky, kx],  n = 2v+pw+kx.
    Rows ky*128 + 84.. and columns 60..127 / 188..255 stay zero.
    """
    rows, cols, cos, cis, kys, kxs = [], [], [], [], [], []
    for ky in range(3):
        for v in range(6):
            for pw in range(2):
                for kx in range(3):
                    n = 2 * v + pw + kx            # always in [0, 14)
                    for ci in range(6):
                        for co in range(10):
                            rows.append(ky * 128 + n * 6 + ci)
                            cols.append(pw * 128 + v * 10 + co)
                            cos.append(co); cis.append(ci)
                            kys.append(ky); kxs.append(kx)
    vals = w2[jnp.array(cos), jnp.array(cis), jnp.array(kys), jnp.array(kxs)]
    m = jnp.zeros((384, 256), jnp.float32)
    return m.at[jnp.array(rows), jnp.array(cols)].set(vals)


def _fc1_mat(fw1):
    """fw1: (64, 360) torch layout (flatten order co*36 + u*6 + v, NCHW).

    Returns G (768, 64): G[u*128 + v*10 + co, k] = fw1[k, co*36 + u*6 + v]
    (rows u*128 + 60..127 zero), so the kernel's (u, v*10+co)-ordered pooled
    features feed fc1 directly — the C-major flatten is folded into the weight.
    """
    g = fw1.reshape(64, 10, 6, 6)          # (k, co, u, v)
    g = jnp.transpose(g, (2, 3, 1, 0))     # (u, v, co, k)
    g = g.reshape(6, 60, 64).astype(jnp.float32)
    gp = jnp.zeros((6, 128, 64), jnp.float32).at[:, :60, :].set(g)
    return gp.reshape(768, 64)


# --------------------------------------------------------------------------- #
# Fused kernel: conv1+relu+pool1+conv2+relu+pool2+fc1+relu+fc2 per batch tile.
# --------------------------------------------------------------------------- #

def _fused_cnn_kernel(x_ref, m1_ref, m2_ref, b1_ref, b2_ref, g_ref,
                      fb1_ref, fw2_ref, fb2_ref, o_ref):
    f32 = jnp.float32
    bf16 = jnp.bfloat16

    x = x_ref[...]                         # (30, TB, 28) bf16, H pre-padded
    tb = x.shape[1]

    # ---- conv1 (1->6, 3x3, pad=1) + pool1: ONE K=84 bf16 MXU matmul ---------
    lhs1 = jnp.concatenate([x[0:28], x[1:29], x[2:30]], axis=-1)   # (28, TB, 84)
    h1 = jnp.dot(lhs1.reshape(28 * tb, 84), m1_ref[...],
                 preferred_element_type=f32)                       # (28*TB, 256)
    h1 = h1.reshape(14, 2, tb, 256)
    h1 = jnp.maximum(h1[:, 0], h1[:, 1])                 # pool over output rows
    h1 = jnp.maximum(h1[:, :, :128], h1[:, :, 128:])     # pool over w parity (aligned)
    p1 = jnp.maximum(h1 + b1_ref[...], 0.0)              # (14, TB, 128) f32, cols 84.. = 0
    p1b = p1.astype(bf16)

    # ---- conv2 (6->10, 3x3, valid) + pool2: ONE K=384 bf16 MXU matmul -------
    lhs2 = jnp.concatenate([p1b[0:12], p1b[1:13], p1b[2:14]], axis=-1)  # (12, TB, 384)
    h2 = jnp.dot(lhs2.reshape(12 * tb, 384), m2_ref[...],
                 preferred_element_type=f32)                       # (12*TB, 256)
    h2 = h2.reshape(6, 2, tb, 256)
    h2 = jnp.maximum(h2[:, 0], h2[:, 1])
    h2 = jnp.maximum(h2[:, :, :128], h2[:, :, 128:])
    p2 = jnp.maximum(h2 + b2_ref[...], 0.0)              # (6, TB, 128) f32, cols 60.. = 0
    p2b = p2.astype(bf16)

    # ---- fc1 (360 -> 64): flatten folded into G, ONE K=768 matmul ----------
    lhs3 = jnp.concatenate([p2b[u] for u in range(6)], axis=-1)    # (TB, 768), aligned
    h3 = jnp.dot(lhs3, g_ref[...], preferred_element_type=f32)     # (TB, 64)
    h3 = jnp.maximum(h3 + fb1_ref[...], 0.0)

    # ---- fc2 (64 -> 10): tiny, keep f32 -------------------------------------
    o_ref[...] = jnp.dot(h3, fw2_ref[...], preferred_element_type=f32) + fb2_ref[...]


# --------------------------------------------------------------------------- #
# Wrapper
# --------------------------------------------------------------------------- #

def forward_pallas(x_nchw, params, batch_tile=256):
    """Full forward pass. x_nchw: (N, 1, 28, 28) float32, params in PyTorch layouts."""
    w1, b1, w2, b2, fw1, fb1, fw2, fb2 = params
    N = x_nchw.shape[0]

    # Batch tile: multiple of 16 (bf16 sublane packing), capped at batch_tile,
    # and sized so the grid has >= 2 steps when possible (v7x has 2 TensorCores).
    half = -(-N // 2)
    tb = min(batch_tile, _round_up(max(half, 16), 16))
    tb = _round_up(tb, 16)
    n_pad = _round_up(N, tb)

    # (N,1,28,28) -> (30, N_pad, 28) bf16: H zero-padded to 30 rows (conv1 pad),
    # H major, batch on sublanes, W on lanes.
    x = x_nchw.reshape(N, 28, 28).astype(jnp.float32)
    x = jnp.pad(x, ((0, n_pad - N), (1, 1), (0, 0)))
    x = jnp.transpose(x, (1, 0, 2)).astype(jnp.bfloat16)

    # Trace-time constants (tiny); matmul operands in bf16, biases in f32.
    m1 = _conv1_mat(w1.astype(jnp.float32)).astype(jnp.bfloat16)     # (84, 256)
    m2 = _conv2_mat(w2.astype(jnp.float32)).astype(jnp.bfloat16)     # (384, 256)
    g = _fc1_mat(fw1.astype(jnp.float32)).astype(jnp.bfloat16)       # (768, 64)
    b1t = jnp.zeros((1, 1, 128), jnp.float32).at[0, 0, :84].set(
        jnp.tile(b1.astype(jnp.float32), 14))
    b2t = jnp.zeros((1, 1, 128), jnp.float32).at[0, 0, :60].set(
        jnp.tile(b2.astype(jnp.float32), 6))
    fb1r = fb1.astype(jnp.float32).reshape(1, 64)
    fw2t = jnp.transpose(fw2.astype(jnp.float32))                    # (64, 10) f32
    fb2r = fb2.astype(jnp.float32).reshape(1, 10)

    out = pl.pallas_call(
        _fused_cnn_kernel,
        out_shape=jax.ShapeDtypeStruct((n_pad, 10), jnp.float32),
        grid=(n_pad // tb,),
        in_specs=[
            pl.BlockSpec((30, tb, 28), lambda i: (0, i, 0)),   # input batch tile (bf16)
            pl.BlockSpec((84, 256), lambda i: (0, 0)),         # conv1 fused matrix
            pl.BlockSpec((384, 256), lambda i: (0, 0)),        # conv2 fused matrix
            pl.BlockSpec((1, 1, 128), lambda i: (0, 0, 0)),    # conv1 bias (tiled, padded)
            pl.BlockSpec((1, 1, 128), lambda i: (0, 0, 0)),    # conv2 bias (tiled, padded)
            pl.BlockSpec((768, 64), lambda i: (0, 0)),         # fc1 weight (permuted, padded)
            pl.BlockSpec((1, 64), lambda i: (0, 0)),           # fc1 bias
            pl.BlockSpec((64, 10), lambda i: (0, 0)),          # fc2 weight (T)
            pl.BlockSpec((1, 10), lambda i: (0, 0)),           # fc2 bias
        ],
        out_specs=pl.BlockSpec((tb, 10), lambda i: (i, 0)),
        compiler_params=pltpu.CompilerParams(
            dimension_semantics=("parallel",),                 # megacore / v7x 2-TC split
            vmem_limit_bytes=32 * 1024 * 1024,                 # fits v7x 64 MiB per-TC VMEM
        ),
    )(x, m1, m2, b1t, b2t, g, fb1r, fw2t, fb2r)

    return out[:N]


# --------------------------------------------------------------------------- #
# Reference (plain JAX, f32 end-to-end)
# --------------------------------------------------------------------------- #

def forward_ref(x, params):
    w1, b1, w2, b2, fw1, fb1, fw2, fb2 = params
    dn = ('NCHW', 'OIHW', 'NCHW')
    y = lax.conv_general_dilated(x, w1, (1, 1), ((1, 1), (1, 1)), dimension_numbers=dn)
    y = jax.nn.relu(y + b1[None, :, None, None])
    y = lax.reduce_window(y, -jnp.inf, lax.max, (1, 1, 2, 2), (1, 1, 2, 2), 'VALID')
    y = lax.conv_general_dilated(y, w2, (1, 1), 'VALID', dimension_numbers=dn)
    y = jax.nn.relu(y + b2[None, :, None, None])
    y = lax.reduce_window(y, -jnp.inf, lax.max, (1, 1, 2, 2), (1, 1, 2, 2), 'VALID')
    y = y.reshape(y.shape[0], -1)
    y = jax.nn.relu(y @ fw1.T + fb1)
    return y @ fw2.T + fb2


# --------------------------------------------------------------------------- #
# Main
# --------------------------------------------------------------------------- #

if __name__ == "__main__":
    key = jax.random.PRNGKey(0)
    ks = jax.random.split(key, 9)

    # deterministic synthetic parameters (PyTorch layouts)
    w1 = jax.random.normal(ks[0], (6, 1, 3, 3), jnp.float32) * 0.2    # conv1.weight
    b1 = jax.random.normal(ks[1], (6,), jnp.float32) * 0.1            # conv1.bias
    w2 = jax.random.normal(ks[2], (10, 6, 3, 3), jnp.float32) * 0.2   # conv2.weight
    b2 = jax.random.normal(ks[3], (10,), jnp.float32) * 0.1           # conv2.bias
    fw1 = jax.random.normal(ks[4], (64, 360), jnp.float32) * 0.05     # fc1.weight
    fb1 = jax.random.normal(ks[5], (64,), jnp.float32) * 0.05         # fc1.bias
    fw2 = jax.random.normal(ks[6], (10, 64), jnp.float32) * 0.1       # fc2.weight
    fb2 = jax.random.normal(ks[7], (10,), jnp.float32) * 0.1          # fc2.bias
    params = (w1, b1, w2, b2, fw1, fb1, fw2, fb2)

    # input: batch=2 MNIST-shaped images, NCHW (28x28 required by fc1's 360-dim input)
    x = jax.random.normal(ks[8], (2, 1, 28, 28), jnp.float32)

    out = jax.block_until_ready(forward_pallas(x, params))
    ref = jax.block_until_ready(forward_ref(x, params))
    # bf16 matmul operands (f32 accumulation) -> loosened tolerance vs f32 reference.
    np.testing.assert_allclose(np.asarray(out), np.asarray(ref), rtol=3e-2, atol=3e-2)

    print("KERNEL_OK")
</pallas_src>

<mosaic_0001>
module attributes {stable_mosaic.version = 11 : i64} {
  func.func @_fused_cnn_kernel(%arg0: i32, %arg1: memref<30x16x28xbf16, #tpu.memory_space<vmem>>, %arg2: memref<84x256xbf16, #tpu.memory_space<vmem>>, %arg3: memref<384x256xbf16, #tpu.memory_space<vmem>>, %arg4: memref<1x1x128xf32, #tpu.memory_space<vmem>>, %arg5: memref<1x1x128xf32, #tpu.memory_space<vmem>>, %arg6: memref<768x64xbf16, #tpu.memory_space<vmem>>, %arg7: memref<1x64xf32, #tpu.memory_space<vmem>>, %arg8: memref<64x10xf32, #tpu.memory_space<vmem>>, %arg9: memref<1x10xf32, #tpu.memory_space<vmem>>, %arg10: memref<16x10xf32, #tpu.memory_space<vmem>>) attributes {dimension_semantics = [#tpu.dimension_semantics<parallel>], iteration_bounds = array<i64: 1>, scalar_prefetch = 0 : i64, scratch_operands = 0 : i64, tpu.core_type = #tpu.core_type<tc>, window_params = [{transform_indices = @transform_0, window_bounds = array<i64: 30, 16, 28>}, {pipeline_mode = #tpu.pipeline_mode<synchronous>, transform_indices = @transform_1, window_bounds = array<i64: 84, 256>}, {pipeline_mode = #tpu.pipeline_mode<synchronous>, transform_indices = @transform_2, window_bounds = array<i64: 384, 256>}, {pipeline_mode = #tpu.pipeline_mode<synchronous>, transform_indices = @transform_3, window_bounds = array<i64: 1, 1, 128>}, {pipeline_mode = #tpu.pipeline_mode<synchronous>, transform_indices = @transform_4, window_bounds = array<i64: 1, 1, 128>}, {pipeline_mode = #tpu.pipeline_mode<synchronous>, transform_indices = @transform_5, window_bounds = array<i64: 768, 64>}, {pipeline_mode = #tpu.pipeline_mode<synchronous>, transform_indices = @transform_6, window_bounds = array<i64: 1, 64>}, {pipeline_mode = #tpu.pipeline_mode<synchronous>, transform_indices = @transform_7, window_bounds = array<i64: 64, 10>}, {pipeline_mode = #tpu.pipeline_mode<synchronous>, transform_indices = @transform_8, window_bounds = array<i64: 1, 10>}, {transform_indices = @transform_9, window_bounds = array<i64: 16, 10>}]} {
    %c0 = arith.constant 0 : index
    %c0_0 = arith.constant 0 : index
    %c0_1 = arith.constant 0 : index
    %0 = vector.load %arg1[%c0, %c0_0, %c0_1] : memref<30x16x28xbf16, #tpu.memory_space<vmem>>, vector<30x16x28xbf16>
    %1 = vector.extract_strided_slice %0 {offsets = [0, 0, 0], sizes = [28, 16, 28], strides = [1, 1, 1]} : vector<30x16x28xbf16> to vector<28x16x28xbf16>
    %2 = vector.extract_strided_slice %0 {offsets = [1, 0, 0], sizes = [28, 16, 28], strides = [1, 1, 1]} : vector<30x16x28xbf16> to vector<28x16x28xbf16>
    %3 = vector.extract_strided_slice %0 {offsets = [2, 0, 0], sizes = [28, 16, 28], strides = [1, 1, 1]} : vector<30x16x28xbf16> to vector<28x16x28xbf16>
    %4 = tpu.concatenate %1, %2, %3 in 2 : vector<28x16x28xbf16>, vector<28x16x28xbf16>, vector<28x16x28xbf16> -> vector<28x16x84xbf16>
    %5 = vector.shape_cast %4 : vector<28x16x84xbf16> to vector<448x84xbf16>
    %c0_2 = arith.constant 0 : index
    %c0_3 = arith.constant 0 : index
    %6 = vector.load %arg2[%c0_2, %c0_3] : memref<84x256xbf16, #tpu.memory_space<vmem>>, vector<84x256xbf16>
    %cst = arith.constant dense<0.000000e+00> : vector<448x256xf32>
    %7 = tpu.matmul %5, %6, %cst {dimension_numbers = #tpu.dot_dimension_numbers<[1], [0], [0], [1], [0, 0, 1, 1], [], []>} : vector<448x84xbf16>, vector<84x256xbf16>, vector<448x256xf32> -> vector<448x256xf32>
    %8 = vector.shape_cast %7 : vector<448x256xf32> to vector<14x2x16x256xf32>
    %9 = vector.extract_strided_slice %8 {offsets = [0, 0, 0, 0], sizes = [14, 1, 16, 256], strides = [1, 1, 1, 1]} : vector<14x2x16x256xf32> to vector<14x1x16x256xf32>
    %10 = vector.shape_cast %9 : vector<14x1x16x256xf32> to vector<14x16x256xf32>
    %11 = vector.extract_strided_slice %8 {offsets = [0, 1, 0, 0], sizes = [14, 1, 16, 256], strides = [1, 1, 1, 1]} : vector<14x2x16x256xf32> to vector<14x1x16x256xf32>
    %12 = vector.shape_cast %11 : vector<14x1x16x256xf32> to vector<14x16x256xf32>
    %13 = arith.maximumf %10, %12 : vector<14x16x256xf32>
    %14 = vector.extract_strided_slice %13 {offsets = [0, 0, 0], sizes = [14, 16, 128], strides = [1, 1, 1]} : vector<14x16x256xf32> to vector<14x16x128xf32>
    %15 = vector.extract_strided_slice %13 {offsets = [0, 0, 128], sizes = [14, 16, 128], strides = [1, 1, 1]} : vector<14x16x256xf32> to vector<14x16x128xf32>
    %16 = arith.maximumf %14, %15 : vector<14x16x128xf32>
    %c0_4 = arith.constant 0 : index
    %c0_5 = arith.constant 0 : index
    %c0_6 = arith.constant 0 : index
    %17 = vector.load %arg4[%c0_4, %c0_5, %c0_6] : memref<1x1x128xf32, #tpu.memory_space<vmem>>, vector<1x1x128xf32>
    %18 = vector.broadcast %17 : vector<1x1x128xf32> to vector<14x16x128xf32>
    %19 = arith.addf %16, %18 : vector<14x16x128xf32>
    %cst_7 = arith.constant 0.000000e+00 : f32
    %20 = vector.broadcast %cst_7 : f32 to vector<14x16x128xf32>
    %21 = arith.maximumf %19, %20 : vector<14x16x128xf32>
    %22 = arith.truncf %21 : vector<14x16x128xf32> to vector<14x16x128xbf16>
    %23 = vector.extract_strided_slice %22 {offsets = [0, 0, 0], sizes = [12, 16, 128], strides = [1, 1, 1]} : vector<14x16x128xbf16> to vector<12x16x128xbf16>
    %24 = vector.extract_strided_slice %22 {offsets = [1, 0, 0], sizes = [12, 16, 128], strides = [1, 1, 1]} : vector<14x16x128xbf16> to vector<12x16x128xbf16>
    %25 = vector.extract_strided_slice %22 {offsets = [2, 0, 0], sizes = [12, 16, 128], strides = [1, 1, 1]} : vector<14x16x128xbf16> to vector<12x16x128xbf16>
    %26 = tpu.concatenate %23, %24, %25 in 2 : vector<12x16x128xbf16>, vector<12x16x128xbf16>, vector<12x16x128xbf16> -> vector<12x16x384xbf16>
    %27 = vector.shape_cast %26 : vector<12x16x384xbf16> to vector<192x384xbf16>
    %c0_8 = arith.constant 0 : index
    %c0_9 = arith.constant 0 : index
    %28 = vector.load %arg3[%c0_8, %c0_9] : memref<384x256xbf16, #tpu.memory_space<vmem>>, vector<384x256xbf16>
    %cst_10 = arith.constant dense<0.000000e+00> : vector<192x256xf32>
    %29 = tpu.matmul %27, %28, %cst_10 {dimension_numbers = #tpu.dot_dimension_numbers<[1], [0], [0], [1], [0, 0, 1, 1], [], []>} : vector<192x384xbf16>, vector<384x256xbf16>, vector<192x256xf32> -> vector<192x256xf32>
    %30 = vector.shape_cast %29 : vector<192x256xf32> to vector<6x2x16x256xf32>
    %31 = vector.extract_strided_slice %30 {offsets = [0, 0, 0, 0], sizes = [6, 1, 16, 256], strides = [1, 1, 1, 1]} : vector<6x2x16x256xf32> to vector<6x1x16x256xf32>
    %32 = vector.shape_cast %31 : vector<6x1x16x256xf32> to vector<6x16x256xf32>
    %33 = vector.extract_strided_slice %30 {offsets = [0, 1, 0, 0], sizes = [6, 1, 16, 256], strides = [1, 1, 1, 1]} : vector<6x2x16x256xf32> to vector<6x1x16x256xf32>
    %34 = vector.shape_cast %33 : vector<6x1x16x256xf32> to vector<6x16x256xf32>
    %35 = arith.maximumf %32, %34 : vector<6x16x256xf32>
    %36 = vector.extract_strided_slice %35 {offsets = [0, 0, 0], sizes = [6, 16, 128], strides = [1, 1, 1]} : vector<6x16x256xf32> to vector<6x16x128xf32>
    %37 = vector.extract_strided_slice %35 {offsets = [0, 0, 128], sizes = [6, 16, 128], strides = [1, 1, 1]} : vector<6x16x256xf32> to vector<6x16x128xf32>
    %38 = arith.maximumf %36, %37 : vector<6x16x128xf32>
    %c0_11 = arith.constant 0 : index
    %c0_12 = arith.constant 0 : index
    %c0_13 = arith.constant 0 : index
    %39 = vector.load %arg5[%c0_11, %c0_12, %c0_13] : memref<1x1x128xf32, #tpu.memory_space<vmem>>, vector<1x1x128xf32>
    %40 = vector.broadcast %39 : vector<1x1x128xf32> to vector<6x16x128xf32>
    %41 = arith.addf %38, %40 : vector<6x16x128xf32>
    %cst_14 = arith.constant 0.000000e+00 : f32
    %42 = vector.broadcast %cst_14 : f32 to vector<6x16x128xf32>
    %43 = arith.maximumf %41, %42 : vector<6x16x128xf32>
    %44 = arith.truncf %43 : vector<6x16x128xf32> to vector<6x16x128xbf16>
    %45 = vector.extract_strided_slice %44 {offsets = [0, 0, 0], sizes = [1, 16, 128], strides = [1, 1, 1]} : vector<6x16x128xbf16> to vector<1x16x128xbf16>
    %46 = vector.shape_cast %45 : vector<1x16x128xbf16> to vector<16x128xbf16>
    %47 = vector.extract_strided_slice %44 {offsets = [1, 0, 0], sizes = [1, 16, 128], strides = [1, 1, 1]} : vector<6x16x128xbf16> to vector<1x16x128xbf16>
    %48 = vector.shape_cast %47 : vector<1x16x128xbf16> to vector<16x128xbf16>
    %49 = vector.extract_strided_slice %44 {offsets = [2, 0, 0], sizes = [1, 16, 128], strides = [1, 1, 1]} : vector<6x16x128xbf16> to vector<1x16x128xbf16>
    %50 = vector.shape_cast %49 : vector<1x16x128xbf16> to vector<16x128xbf16>
    %51 = vector.extract_strided_slice %44 {offsets = [3, 0, 0], sizes = [1, 16, 128], strides = [1, 1, 1]} : vector<6x16x128xbf16> to vector<1x16x128xbf16>
    %52 = vector.shape_cast %51 : vector<1x16x128xbf16> to vector<16x128xbf16>
    %53 = vector.extract_strided_slice %44 {offsets = [4, 0, 0], sizes = [1, 16, 128], strides = [1, 1, 1]} : vector<6x16x128xbf16> to vector<1x16x128xbf16>
    %54 = vector.shape_cast %53 : vector<1x16x128xbf16> to vector<16x128xbf16>
    %55 = vector.extract_strided_slice %44 {offsets = [5, 0, 0], sizes = [1, 16, 128], strides = [1, 1, 1]} : vector<6x16x128xbf16> to vector<1x16x128xbf16>
    %56 = vector.shape_cast %55 : vector<1x16x128xbf16> to vector<16x128xbf16>
    %57 = tpu.concatenate %46, %48, %50, %52, %54, %56 in 1 : vector<16x128xbf16>, vector<16x128xbf16>, vector<16x128xbf16>, vector<16x128xbf16>, vector<16x128xbf16>, vector<16x128xbf16> -> vector<16x768xbf16>
    %c0_15 = arith.constant 0 : index
    %c0_16 = arith.constant 0 : index
    %58 = vector.load %arg6[%c0_15, %c0_16] : memref<768x64xbf16, #tpu.memory_space<vmem>>, vector<768x64xbf16>
    %cst_17 = arith.constant dense<0.000000e+00> : vector<16x64xf32>
    %59 = tpu.matmul %57, %58, %cst_17 {dimension_numbers = #tpu.dot_dimension_numbers<[1], [0], [0], [1], [0, 0, 1, 1], [], []>} : vector<16x768xbf16>, vector<768x64xbf16>, vector<16x64xf32> -> vector<16x64xf32>
    %c0_18 = arith.constant 0 : index
    %c0_19 = arith.constant 0 : index
    %60 = vector.load %arg7[%c0_18, %c0_19] : memref<1x64xf32, #tpu.memory_space<vmem>>, vector<1x64xf32>
    %61 = vector.broadcast %60 : vector<1x64xf32> to vector<16x64xf32>
    %62 = arith.addf %59, %61 : vector<16x64xf32>
    %cst_20 = arith.constant 0.000000e+00 : f32
    %63 = vector.broadcast %cst_20 : f32 to vector<16x64xf32>
    %64 = arith.maximumf %62, %63 : vector<16x64xf32>
    %c0_21 = arith.constant 0 : index
    %c0_22 = arith.constant 0 : index
    %65 = vector.load %arg8[%c0_21, %c0_22] : memref<64x10xf32, #tpu.memory_space<vmem>>, vector<64x10xf32>
    %cst_23 = arith.constant dense<0.000000e+00> : vector<16x10xf32>
    %66 = tpu.matmul %64, %65, %cst_23 {dimension_numbers = #tpu.dot_dimension_numbers<[1], [0], [0], [1], [0, 0, 1, 1], [], []>} : vector<16x64xf32>, vector<64x10xf32>, vector<16x10xf32> -> vector<16x10xf32>
    %c0_24 = arith.constant 0 : index
    %c0_25 = arith.constant 0 : index
    %67 = vector.load %arg9[%c0_24, %c0_25] : memref<1x10xf32, #tpu.memory_space<vmem>>, vector<1x10xf32>
    %68 = vector.broadcast %67 : vector<1x10xf32> to vector<16x10xf32>
    %69 = arith.addf %66, %68 : vector<16x10xf32>
    %c0_26 = arith.constant 0 : index
    %c0_27 = arith.constant 0 : index
    %70 = vector.load %arg10[%c0_26, %c0_27] : memref<16x10xf32, #tpu.memory_space<vmem>>, vector<16x10xf32>
    tpu.vector_store %arg10[%c0_26, %c0_27], %69 {strides = array<i32>} : memref<16x10xf32, #tpu.memory_space<vmem>>, vector<16x10xf32>,
    return
  }
  func.func @transform_0(%arg0: i32) -> (i32, i32, i32) {
    %c0_i32 = arith.constant 0 : i32
    %c0_i32_0 = arith.constant 0 : i32
    %c0_i32_1 = arith.constant 0 : i32
    return %c0_i32, %arg0, %c0_i32_0 : i32, i32, i32
  }
  func.func @transform_1(%arg0: i32) -> (i32, i32) {
    %c0_i32 = arith.constant 0 : i32
    %c0_i32_0 = arith.constant 0 : i32
    %c0_i32_1 = arith.constant 0 : i32
    return %c0_i32, %c0_i32_0 : i32, i32
  }
  func.func @transform_2(%arg0: i32) -> (i32, i32) {
    %c0_i32 = arith.constant 0 : i32
    %c0_i32_0 = arith.constant 0 : i32
    %c0_i32_1 = arith.constant 0 : i32
    return %c0_i32, %c0_i32_0 : i32, i32
  }
  func.func @transform_3(%arg0: i32) -> (i32, i32, i32) {
    %c0_i32 = arith.constant 0 : i32
    %c0_i32_0 = arith.constant 0 : i32
    %c0_i32_1 = arith.constant 0 : i32
    %c0_i32_2 = arith.constant 0 : i32
    return %c0_i32, %c0_i32_0, %c0_i32_1 : i32, i32, i32
  }
  func.func @transform_4(%arg0: i32) -> (i32, i32, i32) {
    %c0_i32 = arith.constant 0 : i32
    %c0_i32_0 = arith.constant 0 : i32
    %c0_i32_1 = arith.constant 0 : i32
    %c0_i32_2 = arith.constant 0 : i32
    return %c0_i32, %c0_i32_0, %c0_i32_1 : i32, i32, i32
  }
  func.func @transform_5(%arg0: i32) -> (i32, i32) {
    %c0_i32 = arith.constant 0 : i32
    %c0_i32_0 = arith.constant 0 : i32
    %c0_i32_1 = arith.constant 0 : i32
    return %c0_i32, %c0_i32_0 : i32, i32
  }
  func.func @transform_6(%arg0: i32) -> (i32, i32) {
    %c0_i32 = arith.constant 0 : i32
    %c0_i32_0 = arith.constant 0 : i32
    %c0_i32_1 = arith.constant 0 : i32
    return %c0_i32, %c0_i32_0 : i32, i32
  }
  func.func @transform_7(%arg0: i32) -> (i32, i32) {
    %c0_i32 = arith.constant 0 : i32
    %c0_i32_0 = arith.constant 0 : i32
    %c0_i32_1 = arith.constant 0 : i32
    return %c0_i32, %c0_i32_0 : i32, i32
  }
  func.func @transform_8(%arg0: i32) -> (i32, i32) {
    %c0_i32 = arith.constant 0 : i32
    %c0_i32_0 = arith.constant 0 : i32
    %c0_i32_1 = arith.constant 0 : i32
    return %c0_i32, %c0_i32_0 : i32, i32
  }
  func.func @transform_9(%arg0: i32) -> (i32, i32) {
    %c0_i32 = arith.constant 0 : i32
    %c0_i32_0 = arith.constant 0 : i32
    return %arg0, %c0_i32 : i32, i32
  }
}

</mosaic_0001>

<llo_original>
// kernel: tpu_custom_call.1
$region0: #{tpu_custom_call.1}
  #allocation0 [shape = 'u32[]', space=smem, size = 0x4, offset = 0x4, fixed_abs, tag = 'smem constant byte address 0x4 - core index']
  #allocation1 [shape = 'u32[144,128]{1,0:T(1,128)}', space=vmem, size = 0x12000, scoped, tag = 'internal scratch']
  %s0 = inlined_call_operand.vmem [shape: bf16[30,16,28], index: 0, kind: input, shape index: {}]
  %s1 = inlined_call_operand.vmem [shape: bf16[84,256], index: 1, kind: input, shape index: {}]
  %s2 = inlined_call_operand.vmem [shape: bf16[384,256], index: 2, kind: input, shape index: {}]
  %s3 = inlined_call_operand.vmem [shape: f32[1,1,128], index: 3, kind: input, shape index: {}]
  %s4 = inlined_call_operand.vmem [shape: f32[1,1,128], index: 4, kind: input, shape index: {}]
  %s5 = inlined_call_operand.vmem [shape: bf16[768,64], index: 5, kind: input, shape index: {}]
  %s6 = inlined_call_operand.vmem [shape: f32[1,64], index: 6, kind: input, shape index: {}]
  %s7 = inlined_call_operand.vmem [shape: f32[64,10], index: 7, kind: input, shape index: {}]
  %s8 = inlined_call_operand.vmem [shape: f32[1,10], index: 8, kind: input, shape index: {}]
  %s9 = inlined_call_operand.hbm [shape: f32[16,10], index: 9, kind: output, shape index: {}]
  %s10 = sld [smem:[#allocation0]]
  $region46: #{tpu_custom_call.1} parent=0
    _
  %s12 = ssub.s32 1, %s10
  %s13 = scalar_select 0, %s12, %s10
  $region1: #{tpu_custom_call.1} parent=0
    #allocation2 [shape = 'u8[8192]{0}', space=vmem, size = 0x2000, scoped, tag = 'output window, operand 0, single buffered']
    #allocation3 [shape = 's32[1]{0}', space=sflag, size = 0x4, scoped, tag = 'scoped memory for tpu_custom_call.1']
    %14 = vsyncpa [#allocation3], 0
    // Predicated region
    $region2: #{tpu_custom_call.1} parent=1 // pred_check
      _
    $region3: #{tpu_custom_call.1} parent=1 // pred_check_branch
      %16 = sbr.rel (0) target = $region5
    $region4: #{tpu_custom_call.1} parent=1 // pred_region
      _
    $region5: #{tpu_custom_call.1} parent=1 // pred_fallthru
      _
    // Predicated region
    $region6: #{tpu_custom_call.1} parent=1 // pred_check
      _
    $region7: #{tpu_custom_call.1} parent=1 // pred_check_branch
      %18 = sbr.rel (0) target = $region9
    $region8: #{tpu_custom_call.1} parent=1 // pred_region
      _
    $region9: #{tpu_custom_call.1} parent=1 // pred_fallthru
      _
    // Predicated region
    $region10: #{tpu_custom_call.1} parent=1 // pred_check
      _
    $region11: #{tpu_custom_call.1} parent=1 // pred_check_branch
      %20 = sbr.rel (0) target = $region13
    $region12: #{tpu_custom_call.1} parent=1 // pred_region
      _
    $region13: #{tpu_custom_call.1} parent=1 // pred_fallthru
      _
    // Predicated region
    $region14: #{tpu_custom_call.1} parent=1 // pred_check
      _
    $region15: #{tpu_custom_call.1} parent=1 // pred_check_branch
      %22 = sbr.rel (0) target = $region17
    $region16: #{tpu_custom_call.1} parent=1 // pred_region
      _
    $region17: #{tpu_custom_call.1} parent=1 // pred_fallthru
      _
    // Predicated region
    $region18: #{tpu_custom_call.1} parent=1 // pred_check
      _
    $region19: #{tpu_custom_call.1} parent=1 // pred_check_branch
      %24 = sbr.rel (0) target = $region21
    $region20: #{tpu_custom_call.1} parent=1 // pred_region
      _
    $region21: #{tpu_custom_call.1} parent=1 // pred_fallthru
      _
    // Predicated region
    $region22: #{tpu_custom_call.1} parent=1 // pred_check
      _
    $region23: #{tpu_custom_call.1} parent=1 // pred_check_branch
      %26 = sbr.rel (0) target = $region25
    $region24: #{tpu_custom_call.1} parent=1 // pred_region
      _
    $region25: #{tpu_custom_call.1} parent=1 // pred_fallthru
      _
    // Predicated region
    $region26: #{tpu_custom_call.1} parent=1 // pred_check
      _
    $region27: #{tpu_custom_call.1} parent=1 // pred_check_branch
      %28 = sbr.rel (0) target = $region29
    $region28: #{tpu_custom_call.1} parent=1 // pred_region
      _
    $region29: #{tpu_custom_call.1} parent=1 // pred_fallthru
      _
    // Predicated region
    $region30: #{tpu_custom_call.1} parent=1 // pred_check
      _
    $region31: #{tpu_custom_call.1} parent=1 // pred_check_branch
      %30 = sbr.rel (0) target = $region33
    $region32: #{tpu_custom_call.1} parent=1 // pred_region
      _
    $region33: #{tpu_custom_call.1} parent=1 // pred_fallthru
      _
    // Predicated region
    $region34: #{tpu_custom_call.1} parent=1 // pred_check
      _
    $region35: #{tpu_custom_call.1} parent=1 // pred_check_branch
      %32 = sbr.rel (0) target = $region37
    $region36: #{tpu_custom_call.1} parent=1 // pred_region
      _
    $region37: #{tpu_custom_call.1} parent=1 // pred_fallthru
      _
    %v34 = vld [vmem:[%s0] sm:$0xf]
    %v35 = vld [vmem:[%s0 + $0x4] sm:$0xf]
    %v36 = vld [vmem:[%s0 + $0x8] sm:$0xf]
    %v37 = vld [vmem:[%s0 + $0xc] sm:$0xf]
    %v38 = vld [vmem:[%s0 + $0x10] sm:$0xf]
    %v39 = vld [vmem:[%s0 + $0x14] sm:$0xf]
    %v40 = vld [vmem:[%s0 + $0x18] sm:$0xf]
    %v41 = vld [vmem:[%s0 + $0x1c] sm:$0xf]
    %v42 = vld [vmem:[%s0 + $0x20] sm:$0xf]
    %v43 = vld [vmem:[%s0 + $0x24] sm:$0xf]
    %v44 = vld [vmem:[%s0 + $0x28] sm:$0xf]
    %v45 = vld [vmem:[%s0 + $0x2c] sm:$0xf]
    %v46 = vld [vmem:[%s0 + $0x30] sm:$0xf]
    %v47 = vld [vmem:[%s0 + $0x34] sm:$0xf]
    %v48 = vld [vmem:[%s0 + $0x38] sm:$0xf]
    %v49 = vld [vmem:[%s0 + $0x3c] sm:$0xf]
    %v50 = vld [vmem:[%s0 + $0x40] sm:$0xf]
    %v51 = vld [vmem:[%s0 + $0x44] sm:$0xf]
    %v52 = vld [vmem:[%s0 + $0x48] sm:$0xf]
    %v53 = vld [vmem:[%s0 + $0x4c] sm:$0xf]
    %v54 = vld [vmem:[%s0 + $0x50] sm:$0xf]
    %v55 = vld [vmem:[%s0 + $0x54] sm:$0xf]
    %v56 = vld [vmem:[%s0 + $0x58] sm:$0xf]
    %v57 = vld [vmem:[%s0 + $0x5c] sm:$0xf]
    %v58 = vld [vmem:[%s0 + $0x60] sm:$0xf]
    %v59 = vld [vmem:[%s0 + $0x64] sm:$0xf]
    %v60 = vld [vmem:[%s0 + $0x68] sm:$0xf]
    %v61 = vld [vmem:[%s0 + $0x6c] sm:$0xf]
    %v62 = vld [vmem:[%s0 + $0x70] sm:$0xf]
    %v63 = vld [vmem:[%s0 + $0x74] sm:$0xf]
    %v64 = vld [vmem:[%s0 + $0x78] sm:$0xf]
    %v65 = vld [vmem:[%s0 + $0x7c] sm:$0xf]
    %v66 = vld [vmem:[%s0 + $0x80] sm:$0xf]
    %v67 = vld [vmem:[%s0 + $0x84] sm:$0xf]
    %v68 = vld [vmem:[%s0 + $0x88] sm:$0xf]
    %v69 = vld [vmem:[%s0 + $0x8c] sm:$0xf]
    %v70 = vld [vmem:[%s0 + $0x90] sm:$0xf]
    %v71 = vld [vmem:[%s0 + $0x94] sm:$0xf]
    %v72 = vld [vmem:[%s0 + $0x98] sm:$0xf]
    %v73 = vld [vmem:[%s0 + $0x9c] sm:$0xf]
    %v74 = vld [vmem:[%s0 + $0xa0] sm:$0xf]
    %v75 = vld [vmem:[%s0 + $0xa4] sm:$0xf]
    %v76 = vld [vmem:[%s0 + $0xa8] sm:$0xf]
    %v77 = vld [vmem:[%s0 + $0xac] sm:$0xf]
    %v78 = vld [vmem:[%s0 + $0xb0] sm:$0xf]
    %v79 = vld [vmem:[%s0 + $0xb4] sm:$0xf]
    %v80 = vld [vmem:[%s0 + $0xb8] sm:$0xf]
    %v81 = vld [vmem:[%s0 + $0xbc] sm:$0xf]
    %v82 = vld [vmem:[%s0 + $0xc0] sm:$0xf]
    %v83 = vld [vmem:[%s0 + $0xc4] sm:$0xf]
    %v84 = vld [vmem:[%s0 + $0xc8] sm:$0xf]
    %v85 = vld [vmem:[%s0 + $0xcc] sm:$0xf]
    %v86 = vld [vmem:[%s0 + $0xd0] sm:$0xf]
    %v87 = vld [vmem:[%s0 + $0xd4] sm:$0xf]
    %v88 = vld [vmem:[%s0 + $0xd8] sm:$0xf]
    %v89 = vld [vmem:[%s0 + $0xdc] sm:$0xf]
    %v90 = vld [vmem:[%s0 + $0xe0] sm:$0xf]
    %v91 = vld [vmem:[%s0 + $0xe4] sm:$0xf]
    %v92 = vld [vmem:[%s0 + $0xe8] sm:$0xf]
    %v93 = vld [vmem:[%s0 + $0xec] sm:$0xf]
    %v150 = vunpack.c.l.b16 %v34
    %v151 = vunpack.c.l.b16 %v35
    %v152 = vunpack.c.l.b16 %v36
    %v153 = vunpack.c.l.b16 %v37
    %v154 = vunpack.c.l.b16 %v38
    %v155 = vunpack.c.l.b16 %v39
    %v156 = vunpack.c.l.b16 %v40
    %v157 = vunpack.c.l.b16 %v41
    %v158 = vunpack.c.l.b16 %v42
    %v159 = vunpack.c.l.b16 %v43
    %v160 = vunpack.c.l.b16 %v44
    %v161 = vunpack.c.l.b16 %v45
    %v162 = vunpack.c.l.b16 %v46
    %v163 = vunpack.c.l.b16 %v47
    %v164 = vunpack.c.l.b16 %v48
    %v165 = vunpack.c.l.b16 %v49
    %v166 = vunpack.c.l.b16 %v50
    %v167 = vunpack.c.l.b16 %v51
    %v168 = vunpack.c.l.b16 %v52
    %v169 = vunpack.c.l.b16 %v53
    %v170 = vunpack.c.l.b16 %v54
    %v171 = vunpack.c.l.b16 %v55
    %v172 = vunpack.c.l.b16 %v56
    %v173 = vunpack.c.l.b16 %v57
    %v174 = vunpack.c.l.b16 %v58
    %v175 = vunpack.c.l.b16 %v59
    %v176 = vunpack.c.l.b16 %v60
    %v177 = vunpack.c.l.b16 %v61
    %v178 = vunpack.c.l.b16 %v62
    %v179 = vunpack.c.l.b16 %v63
    %v180 = vunpack.c.l.b16 %v64
    %v181 = vunpack.c.l.b16 %v65
    %v182 = vunpack.c.l.b16 %v66
    %v183 = vunpack.c.l.b16 %v67
    %v184 = vunpack.c.l.b16 %v68
    %v185 = vunpack.c.l.b16 %v69
    %v186 = vunpack.c.l.b16 %v70
    %v187 = vunpack.c.l.b16 %v71
    %v188 = vunpack.c.l.b16 %v72
    %v189 = vunpack.c.l.b16 %v73
    %v190 = vunpack.c.l.b16 %v74
    %v191 = vunpack.c.l.b16 %v75
    %v192 = vunpack.c.l.b16 %v76
    %v193 = vunpack.c.l.b16 %v77
    %v194 = vunpack.c.l.b16 %v78
    %v195 = vunpack.c.l.b16 %v79
    %v196 = vunpack.c.l.b16 %v80
    %v197 = vunpack.c.l.b16 %v81
    %v198 = vunpack.c.l.b16 %v82
    %v199 = vunpack.c.l.b16 %v83
    %v200 = vunpack.c.l.b16 %v84
    %v201 = vunpack.c.l.b16 %v85
    %v202 = vunpack.c.l.b16 %v86
    %v203 = vunpack.c.l.b16 %v87
    %v204 = vunpack.c.l.b16 %v88
    %v205 = vunpack.c.l.b16 %v89
    %v206 = vpack.c.b16 %v151, %v150
    %v207 = vpack.c.b16 %v153, %v152
    %v208 = vpack.c.b16 %v155, %v154
    %v209 = vpack.c.b16 %v157, %v156
    %v210 = vpack.c.b16 %v159, %v158
    %v211 = vpack.c.b16 %v161, %v160
    %v212 = vpack.c.b16 %v163, %v162
    %v213 = vpack.c.b16 %v165, %v164
    %v214 = vpack.c.b16 %v167, %v166
    %v215 = vpack.c.b16 %v169, %v168
    %v216 = vpack.c.b16 %v171, %v170
    %v217 = vpack.c.b16 %v173, %v172
    %v218 = vpack.c.b16 %v175, %v174
    %v219 = vpack.c.b16 %v177, %v176
    %v220 = vpack.c.b16 %v179, %v178
    %v221 = vpack.c.b16 %v181, %v180
    %v222 = vpack.c.b16 %v183, %v182
    %v223 = vpack.c.b16 %v185, %v184
    %v224 = vpack.c.b16 %v187, %v186
    %v225 = vpack.c.b16 %v189, %v188
    %v226 = vpack.c.b16 %v191, %v190
    %v227 = vpack.c.b16 %v193, %v192
    %v228 = vpack.c.b16 %v195, %v194
    %v229 = vpack.c.b16 %v197, %v196
    %v230 = vpack.c.b16 %v199, %v198
    %v231 = vpack.c.b16 %v201, %v200
    %v232 = vpack.c.b16 %v203, %v202
    %v233 = vpack.c.b16 %v205, %v204
    %v236 = vunpack.c.l.b16 %v90
    %v237 = vunpack.c.l.b16 %v91
    %v238 = vpack.c.b16 %v237, %v236
    %239 = vrot.lane.b32.xlu0 %v207, 28
    %v240 = vpop.permute.xlu0 %239
    %241 = vrot.lane.b32.xlu0 %v208, 28
    %v242 = vpop.permute.xlu0 %241
    %243 = vrot.lane.b32.xlu0 %v209, 28
    %v244 = vpop.permute.xlu0 %243
    %245 = vrot.lane.b32.xlu0 %v210, 28
    %v246 = vpop.permute.xlu0 %245
    %247 = vrot.lane.b32.xlu0 %v211, 28
    %v248 = vpop.permute.xlu0 %247
    %249 = vrot.lane.b32.xlu0 %v212, 28
    %v250 = vpop.permute.xlu0 %249
    %251 = vrot.lane.b32.xlu0 %v213, 28
    %v252 = vpop.permute.xlu0 %251
    %253 = vrot.lane.b32.xlu0 %v214, 28
    %v254 = vpop.permute.xlu0 %253
    %255 = vrot.lane.b32.xlu0 %v215, 28
    %v256 = vpop.permute.xlu0 %255
    %257 = vrot.lane.b32.xlu0 %v216, 28
    %v258 = vpop.permute.xlu0 %257
    %259 = vrot.lane.b32.xlu0 %v217, 28
    %v260 = vpop.permute.xlu0 %259
    %261 = vrot.lane.b32.xlu0 %v218, 28
    %v262 = vpop.permute.xlu0 %261
    %263 = vrot.lane.b32.xlu0 %v219, 28
    %v264 = vpop.permute.xlu0 %263
    %265 = vrot.lane.b32.xlu0 %v220, 28
    %v266 = vpop.permute.xlu0 %265
    %267 = vrot.lane.b32.xlu0 %v221, 28
    %v268 = vpop.permute.xlu0 %267
    %269 = vrot.lane.b32.xlu0 %v222, 28
    %v270 = vpop.permute.xlu0 %269
    %271 = vrot.lane.b32.xlu0 %v223, 28
    %v272 = vpop.permute.xlu0 %271
    %273 = vrot.lane.b32.xlu0 %v224, 28
    %v274 = vpop.permute.xlu0 %273
    %275 = vrot.lane.b32.xlu0 %v225, 28
    %v276 = vpop.permute.xlu0 %275
    %277 = vrot.lane.b32.xlu0 %v226, 28
    %v278 = vpop.permute.xlu0 %277
    %279 = vrot.lane.b32.xlu0 %v227, 28
    %v280 = vpop.permute.xlu0 %279
    %281 = vrot.lane.b32.xlu0 %v228, 28
    %v282 = vpop.permute.xlu0 %281
    %283 = vrot.lane.b32.xlu0 %v229, 28
    %v284 = vpop.permute.xlu0 %283
    %285 = vrot.lane.b32.xlu0 %v230, 28
    %v286 = vpop.permute.xlu0 %285
    %287 = vrot.lane.b32.xlu0 %v231, 28
    %v288 = vpop.permute.xlu0 %287
    %289 = vrot.lane.b32.xlu0 %v232, 28
    %v290 = vpop.permute.xlu0 %289
    %291 = vrot.lane.b32.xlu0 %v233, 28
    %v292 = vpop.permute.xlu0 %291
    %293 = vrot.lane.b32.xlu0 %v238, 28
    %v294 = vpop.permute.xlu0 %293
    %v297 = vunpack.c.l.b16 %v92
    %v298 = vunpack.c.l.b16 %v93
    %v299 = vpack.c.b16 %v298, %v297
    %300 = vrot.lane.b32.xlu0 %v208, 56
    %v301 = vpop.permute.xlu0 %300
    %302 = vrot.lane.b32.xlu0 %v209, 56
    %v303 = vpop.permute.xlu0 %302
    %304 = vrot.lane.b32.xlu0 %v210, 56
    %v305 = vpop.permute.xlu0 %304
    %306 = vrot.lane.b32.xlu0 %v211, 56
    %v307 = vpop.permute.xlu0 %306
    %308 = vrot.lane.b32.xlu0 %v212, 56
    %v309 = vpop.permute.xlu0 %308
    %310 = vrot.lane.b32.xlu0 %v213, 56
    %v311 = vpop.permute.xlu0 %310
    %312 = vrot.lane.b32.xlu0 %v214, 56
    %v313 = vpop.permute.xlu0 %312
    %314 = vrot.lane.b32.xlu0 %v215, 56
    %v315 = vpop.permute.xlu0 %314
    %316 = vrot.lane.b32.xlu0 %v216, 56
    %v317 = vpop.permute.xlu0 %316
    %318 = vrot.lane.b32.xlu0 %v217, 56
    %v319 = vpop.permute.xlu0 %318
    %320 = vrot.lane.b32.xlu0 %v218, 56
    %v321 = vpop.permute.xlu0 %320
    %322 = vrot.lane.b32.xlu0 %v219, 56
    %v323 = vpop.permute.xlu0 %322
    %324 = vrot.lane.b32.xlu0 %v220, 56
    %v325 = vpop.permute.xlu0 %324
    %326 = vrot.lane.b32.xlu0 %v221, 56
    %v327 = vpop.permute.xlu0 %326
    %328 = vrot.lane.b32.xlu0 %v222, 56
    %v329 = vpop.permute.xlu0 %328
    %330 = vrot.lane.b32.xlu0 %v223, 56
    %v331 = vpop.permute.xlu0 %330
    %332 = vrot.lane.b32.xlu0 %v224, 56
    %v333 = vpop.permute.xlu0 %332
    %334 = vrot.lane.b32.xlu0 %v225, 56
    %v335 = vpop.permute.xlu0 %334
    %336 = vrot.lane.b32.xlu0 %v226, 56
    %v337 = vpop.permute.xlu0 %336
    %338 = vrot.lane.b32.xlu0 %v227, 56
    %v339 = vpop.permute.xlu0 %338
    %340 = vrot.lane.b32.xlu0 %v228, 56
    %v341 = vpop.permute.xlu0 %340
    %342 = vrot.lane.b32.xlu0 %v229, 56
    %v343 = vpop.permute.xlu0 %342
    %344 = vrot.lane.b32.xlu0 %v230, 56
    %v345 = vpop.permute.xlu0 %344
    %346 = vrot.lane.b32.xlu0 %v231, 56
    %v347 = vpop.permute.xlu0 %346
    %348 = vrot.lane.b32.xlu0 %v232, 56
    %v349 = vpop.permute.xlu0 %348
    %350 = vrot.lane.b32.xlu0 %v233, 56
    %v351 = vpop.permute.xlu0 %350
    %352 = vrot.lane.b32.xlu0 %v238, 56
    %v353 = vpop.permute.xlu0 %352
    %354 = vrot.lane.b32.xlu0 %v299, 56
    %v355 = vpop.permute.xlu0 %354
    %vm356 = vcmask 228352
    %v359 = vsel %vm356, %v206, %v240
    %v362 = vsel %vm356, %v207, %v242
    %v365 = vsel %vm356, %v208, %v244
    %v368 = vsel %vm356, %v209, %v246
    %v371 = vsel %vm356, %v210, %v248
    %v374 = vsel %vm356, %v211, %v250
    %v377 = vsel %vm356, %v212, %v252
    %v380 = vsel %vm356, %v213, %v254
    %v383 = vsel %vm356, %v214, %v256
    %v386 = vsel %vm356, %v215, %v258
    %v389 = vsel %vm356, %v216, %v260
    %v392 = vsel %vm356, %v217, %v262
    %v395 = vsel %vm356, %v218, %v264
    %v398 = vsel %vm356, %v219, %v266
    %v401 = vsel %vm356, %v220, %v268
    %v404 = vsel %vm356, %v221, %v270
    %v407 = vsel %vm356, %v222, %v272
    %v410 = vsel %vm356, %v223, %v274
    %v413 = vsel %vm356, %v224, %v276
    %v416 = vsel %vm356, %v225, %v278
    %v419 = vsel %vm356, %v226, %v280
    %v422 = vsel %vm356, %v227, %v282
    %v425 = vsel %vm356, %v228, %v284
    %v428 = vsel %vm356, %v229, %v286
    %v431 = vsel %vm356, %v230, %v288
    %v434 = vsel %vm356, %v231, %v290
    %v437 = vsel %vm356, %v232, %v292
    %v440 = vsel %vm356, %v233, %v294
    %vm441 = vcmask 457728
    %v443 = vsel %vm441, %v359, %v301
    %v445 = vsel %vm441, %v362, %v303
    %v447 = vsel %vm441, %v365, %v305
    %v449 = vsel %vm441, %v368, %v307
    %v451 = vsel %vm441, %v371, %v309
    %v453 = vsel %vm441, %v374, %v311
    %v455 = vsel %vm441, %v377, %v313
    %v457 = vsel %vm441, %v380, %v315
    %v459 = vsel %vm441, %v383, %v317
    %v461 = vsel %vm441, %v386, %v319
    %v463 = vsel %vm441, %v389, %v321
    %v465 = vsel %vm441, %v392, %v323
    %v467 = vsel %vm441, %v395, %v325
    %v469 = vsel %vm441, %v398, %v327
    %v471 = vsel %vm441, %v401, %v329
    %v473 = vsel %vm441, %v404, %v331
    %v475 = vsel %vm441, %v407, %v333
    %v477 = vsel %vm441, %v410, %v335
    %v479 = vsel %vm441, %v413, %v337
    %v481 = vsel %vm441, %v416, %v339
    %v483 = vsel %vm441, %v419, %v341
    %v485 = vsel %vm441, %v422, %v343
    %v487 = vsel %vm441, %v425, %v345
    %v489 = vsel %vm441, %v428, %v347
    %v491 = vsel %vm441, %v431, %v349
    %v493 = vsel %vm441, %v434, %v351
    %v495 = vsel %vm441, %v437, %v353
    %v497 = vsel %vm441, %v440, %v355
    %v498 = vld [vmem:[%s1] sm:$0xff]
    %v499 = vld [vmem:[%s1 + $0x8] sm:$0xff]
    %v500 = vld [vmem:[%s1 + $0x10] sm:$0xff]
    %v501 = vld [vmem:[%s1 + $0x18] sm:$0xff]
    %v502 = vld [vmem:[%s1 + $0x20] sm:$0xff]
    %v503 = vld [vmem:[%s1 + $0x28] sm:$0xff]
    %v504 = vld [vmem:[%s1 + $0x30] sm:$0xff]
    %v505 = vld [vmem:[%s1 + $0x38] sm:$0xff]
    %v506 = vld [vmem:[%s1 + $0x40] sm:$0xff]
    %v507 = vld [vmem:[%s1 + $0x48] sm:$0xff]
    %v508 = vld [vmem:[%s1 + $0x50] sm:$0x33]
    %v520 = vunpack.c.l.b16 %v498
    %v521 = vunpack.c.h.b16 %v498
    %v522 = vunpack.c.l.b16 %v499
    %v523 = vunpack.c.h.b16 %v499
    %v524 = vunpack.c.l.b16 %v500
    %v525 = vunpack.c.h.b16 %v500
    %v526 = vunpack.c.l.b16 %v501
    %v527 = vunpack.c.h.b16 %v501
    %v528 = vunpack.c.l.b16 %v502
    %v529 = vunpack.c.h.b16 %v502
    %v530 = vunpack.c.l.b16 %v503
    %v531 = vunpack.c.h.b16 %v503
    %v532 = vunpack.c.l.b16 %v504
    %v533 = vunpack.c.h.b16 %v504
    %v534 = vunpack.c.l.b16 %v505
    %v535 = vunpack.c.h.b16 %v505
    %v536 = vunpack.c.l.b16 %v506
    %v537 = vunpack.c.h.b16 %v506
    %v538 = vunpack.c.l.b16 %v507
    %v539 = vunpack.c.h.b16 %v507
    %v540 = vunpack.c.l.b16 %v508
    %v541 = vunpack.c.h.b16 %v508
    %v542 = vpack.c.b16 %v522, %v520
    %v543 = vpack.c.b16 %v523, %v521
    %v544 = vpack.c.b16 %v526, %v524
    %v545 = vpack.c.b16 %v527, %v525
    %v546 = vpack.c.b16 %v530, %v528
    %v547 = vpack.c.b16 %v531, %v529
    %v548 = vpack.c.b16 %v534, %v532
    %v549 = vpack.c.b16 %v535, %v533
    %v550 = vpack.c.b16 %v538, %v536
    %v551 = vpack.c.b16 %v539, %v537
    %v552 = vpack.c.b16 %v540, %v540
    %v553 = vpack.c.b16 %v541, %v541
    %vm564 = vcmask 687104
    %v565 = vsel %vm564, %v443, 0
    %v567 = vsel %vm564, %v445, 0
    %v569 = vsel %vm564, %v447, 0
    %v571 = vsel %vm564, %v449, 0
    %v573 = vsel %vm564, %v451, 0
    %v575 = vsel %vm564, %v453, 0
    %v577 = vsel %vm564, %v455, 0
    %v579 = vsel %vm564, %v457, 0
    %v581 = vsel %vm564, %v459, 0
    %v583 = vsel %vm564, %v461, 0
    %v585 = vsel %vm564, %v463, 0
    %v587 = vsel %vm564, %v465, 0
    %v589 = vsel %vm564, %v467, 0
    %v591 = vsel %vm564, %v469, 0
    %v593 = vsel %vm564, %v471, 0
    %v595 = vsel %vm564, %v473, 0
    %v597 = vsel %vm564, %v475, 0
    %v599 = vsel %vm564, %v477, 0
    %v601 = vsel %vm564, %v479, 0
    %v603 = vsel %vm564, %v481, 0
    %v605 = vsel %vm564, %v483, 0
    %v607 = vsel %vm564, %v485, 0
    %v609 = vsel %vm564, %v487, 0
    %v611 = vsel %vm564, %v489, 0
    %v613 = vsel %vm564, %v491, 0
    %v615 = vsel %vm564, %v493, 0
    %v617 = vsel %vm564, %v495, 0
    %v619 = vsel %vm564, %v497, 0
    %vm621 = vcmask 1041408
    %v623 = vsel %vm621, %v552, 0
    %v626 = vsel %vm621, %v553, 0
    %628 = vmatprep.subr.bf16.mxu0 0
    %629 = vmatpush1.bf16.msra.mxu0 0
    %630 = vmatprep.subr.bf16.mxu0 0
    %631 = vmatpush1.bf16.msra.mxu0 0
    %632 = vmatprep.subr.bf16.mxu0 %v626
    %633 = vmatpush1.bf16.msra.mxu0 %v623
    %634 = vmatprep.subr.bf16.mxu0 %v551
    %635 = vmatpush1.bf16.msra.mxu0 %v550
    %636 = vmatprep.subr.bf16.mxu0 %v549
    %637 = vmatpush1.bf16.msra.mxu0 %v548
    %638 = vmatprep.subr.bf16.mxu0 %v547
    %639 = vmatpush1.bf16.msra.mxu0 %v546
    %640 = vmatprep.subr.bf16.mxu0 %v545
    %641 = vmatpush1.bf16.msra.mxu0 %v544
    %642 = vmatprep.subr.bf16.mxu0 %v543
    %643 = vmatpush1.bf16.msra.mxu0 %v542
    %644 = vmatprep.subr.bf16.mxu0 0
    %645 = vmatpush2.bf16.msra.mxu0 0
    %646 = vmatprep.subr.bf16.mxu0 0
    %647 = vmatpush2.bf16.msra.mxu0 0
    %648 = vmatprep.subr.bf16.mxu0 0
    %649 = vmatpush2.bf16.msra.mxu0 0
    %650 = vmatprep.subr.bf16.mxu0 0
    %651 = vmatpush2.bf16.msra.mxu0 0
    %652 = vmatprep.subr.bf16.mxu0 0
    %653 = vmatpush2.bf16.msra.mxu0 0
    %654 = vmatprep.subr.bf16.mxu0 0
    %655 = vmatpush2.bf16.msra.mxu0 0
    %656 = vmatprep.subr.bf16.mxu0 0
    %657 = vmatpush2.bf16.msra.mxu0 0
    %658 = vmatprep.subr.bf16.mxu0 0
    %659 = vmatpush2.bf16.msra.mxu0 0
    %660 = vmatprep.mubr.bf16.mxu0 0
    %661 = vmatmul.mubr.bf16.gmra.mxu0 %v565
    %v662 = vpop.f32.mrf.mxu0
    %v663 = vadd.f32 0.0, %v662
    %v664 = vpop.f32.mrf.mxu0
    %v665 = vadd.f32 0.0, %v664
    %v666 = vpop.f32.mrf.mxu0
    %v667 = vadd.f32 0.0, %v666
    %v668 = vpop.f32.mrf.mxu0
    %v669 = vadd.f32 0.0, %v668
    %670 = vmatprep.mubr.bf16.mxu0 0
    %671 = vmatmul.mubr.bf16.gmra.mxu0 %v567
    %v672 = vpop.f32.mrf.mxu0
    %v673 = vadd.f32 0.0, %v672
    %v674 = vpop.f32.mrf.mxu0
    %v675 = vadd.f32 0.0, %v674
    %v676 = vpop.f32.mrf.mxu0
    %v677 = vadd.f32 0.0, %v676
    %v678 = vpop.f32.mrf.mxu0
    %v679 = vadd.f32 0.0, %v678
    %680 = vmatprep.mubr.bf16.mxu0 0
    %681 = vmatmul.mubr.bf16.gmra.mxu0 %v569
    %v682 = vpop.f32.mrf.mxu0
    %v683 = vadd.f32 0.0, %v682
    %v684 = vpop.f32.mrf.mxu0
    %v685 = vadd.f32 0.0, %v684
    %v686 = vpop.f32.mrf.mxu0
    %v687 = vadd.f32 0.0, %v686
    %v688 = vpop.f32.mrf.mxu0
    %v689 = vadd.f32 0.0, %v688
    %690 = vmatprep.mubr.bf16.mxu0 0
    %691 = vmatmul.mubr.bf16.gmra.mxu0 %v571
    %v692 = vpop.f32.mrf.mxu0
    %v693 = vadd.f32 0.0, %v692
    %v694 = vpop.f32.mrf.mxu0
    %v695 = vadd.f32 0.0, %v694
    %v696 = vpop.f32.mrf.mxu0
    %v697 = vadd.f32 0.0, %v696
    %v698 = vpop.f32.mrf.mxu0
    %v699 = vadd.f32 0.0, %v698
    %700 = vmatprep.mubr.bf16.mxu0 0
    %701 = vmatmul.mubr.bf16.gmra.mxu0 %v573
    %v702 = vpop.f32.mrf.mxu0
    %v703 = vadd.f32 0.0, %v702
    %v704 = vpop.f32.mrf.mxu0
    %v705 = vadd.f32 0.0, %v704
    %v706 = vpop.f32.mrf.mxu0
    %v707 = vadd.f32 0.0, %v706
    %v708 = vpop.f32.mrf.mxu0
    %v709 = vadd.f32 0.0, %v708
    %710 = vmatprep.mubr.bf16.mxu0 0
    %711 = vmatmul.mubr.bf16.gmra.mxu0 %v575
    %v712 = vpop.f32.mrf.mxu0
    %v713 = vadd.f32 0.0, %v712
    %v714 = vpop.f32.mrf.mxu0
    %v715 = vadd.f32 0.0, %v714
    %v716 = vpop.f32.mrf.mxu0
    %v717 = vadd.f32 0.0, %v716
    %v718 = vpop.f32.mrf.mxu0
    %v719 = vadd.f32 0.0, %v718
    %720 = vmatprep.mubr.bf16.mxu0 0
    %721 = vmatmul.mubr.bf16.gmra.mxu0 %v577
    %v722 = vpop.f32.mrf.mxu0
    %v723 = vadd.f32 0.0, %v722
    %v724 = vpop.f32.mrf.mxu0
    %v725 = vadd.f32 0.0, %v724
    %v726 = vpop.f32.mrf.mxu0
    %v727 = vadd.f32 0.0, %v726
    %v728 = vpop.f32.mrf.mxu0
    %v729 = vadd.f32 0.0, %v728
    %730 = vmatprep.mubr.bf16.mxu0 0
    %731 = vmatmul.mubr.bf16.gmra.mxu0 %v579
    %v732 = vpop.f32.mrf.mxu0
    %v733 = vadd.f32 0.0, %v732
    %v734 = vpop.f32.mrf.mxu0
    %v735 = vadd.f32 0.0, %v734
    %v736 = vpop.f32.mrf.mxu0
    %v737 = vadd.f32 0.0, %v736
    %v738 = vpop.f32.mrf.mxu0
    %v739 = vadd.f32 0.0, %v738
    %740 = vmatprep.mubr.bf16.mxu0 0
    %741 = vmatmul.mubr.bf16.gmra.mxu0 %v581
    %v742 = vpop.f32.mrf.mxu0
    %v743 = vadd.f32 0.0, %v742
    %v744 = vpop.f32.mrf.mxu0
    %v745 = vadd.f32 0.0, %v744
    %v746 = vpop.f32.mrf.mxu0
    %v747 = vadd.f32 0.0, %v746
    %v748 = vpop.f32.mrf.mxu0
    %v749 = vadd.f32 0.0, %v748
    %750 = vmatprep.mubr.bf16.mxu0 0
    %751 = vmatmul.mubr.bf16.gmra.mxu0 %v583
    %v752 = vpop.f32.mrf.mxu0
    %v753 = vadd.f32 0.0, %v752
    %v754 = vpop.f32.mrf.mxu0
    %v755 = vadd.f32 0.0, %v754
    %v756 = vpop.f32.mrf.mxu0
    %v757 = vadd.f32 0.0, %v756
    %v758 = vpop.f32.mrf.mxu0
    %v759 = vadd.f32 0.0, %v758
    %760 = vmatprep.mubr.bf16.mxu0 0
    %761 = vmatmul.mubr.bf16.gmra.mxu0 %v585
    %v762 = vpop.f32.mrf.mxu0
    %v763 = vadd.f32 0.0, %v762
    %v764 = vpop.f32.mrf.mxu0
    %v765 = vadd.f32 0.0, %v764
    %v766 = vpop.f32.mrf.mxu0
    %v767 = vadd.f32 0.0, %v766
    %v768 = vpop.f32.mrf.mxu0
    %v769 = vadd.f32 0.0, %v768
    %770 = vmatprep.mubr.bf16.mxu0 0
    %771 = vmatmul.mubr.bf16.gmra.mxu0 %v587
    %v772 = vpop.f32.mrf.mxu0
    %v773 = vadd.f32 0.0, %v772
    %v774 = vpop.f32.mrf.mxu0
    %v775 = vadd.f32 0.0, %v774
    %v776 = vpop.f32.mrf.mxu0
    %v777 = vadd.f32 0.0, %v776
    %v778 = vpop.f32.mrf.mxu0
    %v779 = vadd.f32 0.0, %v778
    %780 = vmatprep.mubr.bf16.mxu0 0
    %781 = vmatmul.mubr.bf16.gmra.mxu0 %v589
    %v782 = vpop.f32.mrf.mxu0
    %v783 = vadd.f32 0.0, %v782
    %v784 = vpop.f32.mrf.mxu0
    %v785 = vadd.f32 0.0, %v784
    %v786 = vpop.f32.mrf.mxu0
    %v787 = vadd.f32 0.0, %v786
    %v788 = vpop.f32.mrf.mxu0
    %v789 = vadd.f32 0.0, %v788
    %790 = vmatprep.mubr.bf16.mxu0 0
    %791 = vmatmul.mubr.bf16.gmra.mxu0 %v591
    %v792 = vpop.f32.mrf.mxu0
    %v793 = vadd.f32 0.0, %v792
    %v794 = vpop.f32.mrf.mxu0
    %v795 = vadd.f32 0.0, %v794
    %v796 = vpop.f32.mrf.mxu0
    %v797 = vadd.f32 0.0, %v796
    %v798 = vpop.f32.mrf.mxu0
    %v799 = vadd.f32 0.0, %v798
    %800 = vmatprep.mubr.bf16.mxu0 0
    %801 = vmatmul.mubr.bf16.gmra.mxu0 %v593
    %v802 = vpop.f32.mrf.mxu0
    %v803 = vadd.f32 0.0, %v802
    %v804 = vpop.f32.mrf.mxu0
    %v805 = vadd.f32 0.0, %v804
    %v806 = vpop.f32.mrf.mxu0
    %v807 = vadd.f32 0.0, %v806
    %v808 = vpop.f32.mrf.mxu0
    %v809 = vadd.f32 0.0, %v808
    %810 = vmatprep.mubr.bf16.mxu0 0
    %811 = vmatmul.mubr.bf16.gmra.mxu0 %v595
    %v812 = vpop.f32.mrf.mxu0
    %v813 = vadd.f32 0.0, %v812
    %v814 = vpop.f32.mrf.mxu0
    %v815 = vadd.f32 0.0, %v814
    %v816 = vpop.f32.mrf.mxu0
    %v817 = vadd.f32 0.0, %v816
    %v818 = vpop.f32.mrf.mxu0
    %v819 = vadd.f32 0.0, %v818
    %820 = vmatprep.mubr.bf16.mxu0 0
    %821 = vmatmul.mubr.bf16.gmra.mxu0 %v597
    %v822 = vpop.f32.mrf.mxu0
    %v823 = vadd.f32 0.0, %v822
    %v824 = vpop.f32.mrf.mxu0
    %v825 = vadd.f32 0.0, %v824
    %v826 = vpop.f32.mrf.mxu0
    %v827 = vadd.f32 0.0, %v826
    %v828 = vpop.f32.mrf.mxu0
    %v829 = vadd.f32 0.0, %v828
    %830 = vmatprep.mubr.bf16.mxu0 0
    %831 = vmatmul.mubr.bf16.gmra.mxu0 %v599
    %v832 = vpop.f32.mrf.mxu0
    %v833 = vadd.f32 0.0, %v832
    %v834 = vpop.f32.mrf.mxu0
    %v835 = vadd.f32 0.0, %v834
    %v836 = vpop.f32.mrf.mxu0
    %v837 = vadd.f32 0.0, %v836
    %v838 = vpop.f32.mrf.mxu0
    %v839 = vadd.f32 0.0, %v838
    %840 = vmatprep.mubr.bf16.mxu0 0
    %841 = vmatmul.mubr.bf16.gmra.mxu0 %v601
    %v842 = vpop.f32.mrf.mxu0
    %v843 = vadd.f32 0.0, %v842
    %v844 = vpop.f32.mrf.mxu0
    %v845 = vadd.f32 0.0, %v844
    %v846 = vpop.f32.mrf.mxu0
    %v847 = vadd.f32 0.0, %v846
    %v848 = vpop.f32.mrf.mxu0
    %v849 = vadd.f32 0.0, %v848
    %850 = vmatprep.mubr.bf16.mxu0 0
    %851 = vmatmul.mubr.bf16.gmra.mxu0 %v603
    %v852 = vpop.f32.mrf.mxu0
    %v853 = vadd.f32 0.0, %v852
    %v854 = vpop.f32.mrf.mxu0
    %v855 = vadd.f32 0.0, %v854
    %v856 = vpop.f32.mrf.mxu0
    %v857 = vadd.f32 0.0, %v856
    %v858 = vpop.f32.mrf.mxu0
    %v859 = vadd.f32 0.0, %v858
    %860 = vmatprep.mubr.bf16.mxu0 0
    %861 = vmatmul.mubr.bf16.gmra.mxu0 %v605
    %v862 = vpop.f32.mrf.mxu0
    %v863 = vadd.f32 0.0, %v862
    %v864 = vpop.f32.mrf.mxu0
    %v865 = vadd.f32 0.0, %v864
    %v866 = vpop.f32.mrf.mxu0
    %v867 = vadd.f32 0.0, %v866
    %v868 = vpop.f32.mrf.mxu0
    %v869 = vadd.f32 0.0, %v868
    %870 = vmatprep.mubr.bf16.mxu0 0
    %871 = vmatmul.mubr.bf16.gmra.mxu0 %v607
    %v872 = vpop.f32.mrf.mxu0
    %v873 = vadd.f32 0.0, %v872
    %v874 = vpop.f32.mrf.mxu0
    %v875 = vadd.f32 0.0, %v874
    %v876 = vpop.f32.mrf.mxu0
    %v877 = vadd.f32 0.0, %v876
    %v878 = vpop.f32.mrf.mxu0
    %v879 = vadd.f32 0.0, %v878
    %880 = vmatprep.mubr.bf16.mxu0 0
    %881 = vmatmul.mubr.bf16.gmra.mxu0 %v609
    %v882 = vpop.f32.mrf.mxu0
    %v883 = vadd.f32 0.0, %v882
    %v884 = vpop.f32.mrf.mxu0
    %v885 = vadd.f32 0.0, %v884
    %v886 = vpop.f32.mrf.mxu0
    %v887 = vadd.f32 0.0, %v886
    %v888 = vpop.f32.mrf.mxu0
    %v889 = vadd.f32 0.0, %v888
    %890 = vmatprep.mubr.bf16.mxu0 0
    %891 = vmatmul.mubr.bf16.gmra.mxu0 %v611
    %v892 = vpop.f32.mrf.mxu0
    %v893 = vadd.f32 0.0, %v892
    %v894 = vpop.f32.mrf.mxu0
    %v895 = vadd.f32 0.0, %v894
    %v896 = vpop.f32.mrf.mxu0
    %v897 = vadd.f32 0.0, %v896
    %v898 = vpop.f32.mrf.mxu0
    %v899 = vadd.f32 0.0, %v898
    %900 = vmatprep.mubr.bf16.mxu0 0
    %901 = vmatmul.mubr.bf16.gmra.mxu0 %v613
    %v902 = vpop.f32.mrf.mxu0
    %v903 = vadd.f32 0.0, %v902
    %v904 = vpop.f32.mrf.mxu0
    %v905 = vadd.f32 0.0, %v904
    %v906 = vpop.f32.mrf.mxu0
    %v907 = vadd.f32 0.0, %v906
    %v908 = vpop.f32.mrf.mxu0
    %v909 = vadd.f32 0.0, %v908
    %910 = vmatprep.mubr.bf16.mxu0 0
    %911 = vmatmul.mubr.bf16.gmra.mxu0 %v615
    %v912 = vpop.f32.mrf.mxu0
    %v913 = vadd.f32 0.0, %v912
    %v914 = vpop.f32.mrf.mxu0
    %v915 = vadd.f32 0.0, %v914
    %v916 = vpop.f32.mrf.mxu0
    %v917 = vadd.f32 0.0, %v916
    %v918 = vpop.f32.mrf.mxu0
    %v919 = vadd.f32 0.0, %v918
    %920 = vmatprep.mubr.bf16.mxu0 0
    %921 = vmatmul.mubr.bf16.gmra.mxu0 %v617
    %v922 = vpop.f32.mrf.mxu0
    %v923 = vadd.f32 0.0, %v922
    %v924 = vpop.f32.mrf.mxu0
    %v925 = vadd.f32 0.0, %v924
    %v926 = vpop.f32.mrf.mxu0
    %v927 = vadd.f32 0.0, %v926
    %v928 = vpop.f32.mrf.mxu0
    %v929 = vadd.f32 0.0, %v928
    %930 = vmatprep.mubr.bf16.mxu0 0
    %931 = vmatmul.mubr.bf16.gmra.mxu0 %v619
    %v932 = vpop.f32.mrf.mxu0
    %v933 = vadd.f32 0.0, %v932
    %v934 = vpop.f32.mrf.mxu0
    %v935 = vadd.f32 0.0, %v934
    %v936 = vpop.f32.mrf.mxu0
    %v937 = vadd.f32 0.0, %v936
    %v938 = vpop.f32.mrf.mxu0
    %v939 = vadd.f32 0.0, %v938
    %940 = vdwg.mxu0
    %v941 = vmax.f32 %v663, %v673
    %v942 = vmax.f32 %v665, %v675
    %v943 = vmax.f32 %v667, %v677
    %v944 = vmax.f32 %v669, %v679
    %v945 = vmax.f32 %v683, %v693
    %v946 = vmax.f32 %v685, %v695
    %v947 = vmax.f32 %v687, %v697
    %v948 = vmax.f32 %v689, %v699
    %v949 = vmax.f32 %v703, %v713
    %v950 = vmax.f32 %v705, %v715
    %v951 = vmax.f32 %v707, %v717
    %v952 = vmax.f32 %v709, %v719
    %v953 = vmax.f32 %v723, %v733
    %v954 = vmax.f32 %v725, %v735
    %v955 = vmax.f32 %v727, %v737
    %v956 = vmax.f32 %v729, %v739
    %v957 = vmax.f32 %v743, %v753
    %v958 = vmax.f32 %v745, %v755
    %v959 = vmax.f32 %v747, %v757
    %v960 = vmax.f32 %v749, %v759
    %v961 = vmax.f32 %v763, %v773
    %v962 = vmax.f32 %v765, %v775
    %v963 = vmax.f32 %v767, %v777
    %v964 = vmax.f32 %v769, %v779
    %v965 = vmax.f32 %v783, %v793
    %v966 = vmax.f32 %v785, %v795
    %v967 = vmax.f32 %v787, %v797
    %v968 = vmax.f32 %v789, %v799
    %v969 = vmax.f32 %v803, %v813
    %v970 = vmax.f32 %v805, %v815
    %v971 = vmax.f32 %v807, %v817
    %v972 = vmax.f32 %v809, %v819
    %v973 = vmax.f32 %v823, %v833
    %v974 = vmax.f32 %v825, %v835
    %v975 = vmax.f32 %v827, %v837
    %v976 = vmax.f32 %v829, %v839
    %v977 = vmax.f32 %v843, %v853
    %v978 = vmax.f32 %v845, %v855
    %v979 = vmax.f32 %v847, %v857
    %v980 = vmax.f32 %v849, %v859
    %v981 = vmax.f32 %v863, %v873
    %v982 = vmax.f32 %v865, %v875
    %v983 = vmax.f32 %v867, %v877
    %v984 = vmax.f32 %v869, %v879
    %v985 = vmax.f32 %v883, %v893
    %v986 = vmax.f32 %v885, %v895
    %v987 = vmax.f32 %v887, %v897
    %v988 = vmax.f32 %v889, %v899
    %v989 = vmax.f32 %v903, %v913
    %v990 = vmax.f32 %v905, %v915
    %v991 = vmax.f32 %v907, %v917
    %v992 = vmax.f32 %v909, %v919
    %v993 = vmax.f32 %v923, %v933
    %v994 = vmax.f32 %v925, %v935
    %v995 = vmax.f32 %v927, %v937
    %v996 = vmax.f32 %v929, %v939
    %v997 = vmax.f32 %v941, %v942
    %v998 = vmax.f32 %v943, %v944
    %v999 = vmax.f32 %v945, %v946
    %v1000 = vmax.f32 %v947, %v948
    %v1001 = vmax.f32 %v949, %v950
    %v1002 = vmax.f32 %v951, %v952
    %v1003 = vmax.f32 %v953, %v954
    %v1004 = vmax.f32 %v955, %v956
    %v1005 = vmax.f32 %v957, %v958
    %v1006 = vmax.f32 %v959, %v960
    %v1007 = vmax.f32 %v961, %v962
    %v1008 = vmax.f32 %v963, %v964
    %v1009 = vmax.f32 %v965, %v966
    %v1010 = vmax.f32 %v967, %v968
    %v1011 = vmax.f32 %v969, %v970
    %v1012 = vmax.f32 %v971, %v972
    %v1013 = vmax.f32 %v973, %v974
    %v1014 = vmax.f32 %v975, %v976
    %v1015 = vmax.f32 %v977, %v978
    %v1016 = vmax.f32 %v979, %v980
    %v1017 = vmax.f32 %v981, %v982
    %v1018 = vmax.f32 %v983, %v984
    %v1019 = vmax.f32 %v985, %v986
    %v1020 = vmax.f32 %v987, %v988
    %v1021 = vmax.f32 %v989, %v990
    %v1022 = vmax.f32 %v991, %v992
    %v1023 = vmax.f32 %v993, %v994
    %v1024 = vmax.f32 %v995, %v996
    %v1025 = vld [vmem:[%s3] sm:$0x1]
    %v1027 = vlaneseq
    %v1028 = vshrl.u32 %v1027, 7
    %v1029 = vsub.s32 0, %v1028
    %v1030 = vrot.slane %v1025, %v1029
    %v1032 = vadd.f32 %v997, %v1030
    %v1033 = vadd.f32 %v998, %v1030
    %v1034 = vadd.f32 %v999, %v1030
    %v1035 = vadd.f32 %v1000, %v1030
    %v1036 = vadd.f32 %v1001, %v1030
    %v1037 = vadd.f32 %v1002, %v1030
    %v1038 = vadd.f32 %v1003, %v1030
    %v1039 = vadd.f32 %v1004, %v1030
    %v1040 = vadd.f32 %v1005, %v1030
    %v1041 = vadd.f32 %v1006, %v1030
    %v1042 = vadd.f32 %v1007, %v1030
    %v1043 = vadd.f32 %v1008, %v1030
    %v1044 = vadd.f32 %v1009, %v1030
    %v1045 = vadd.f32 %v1010, %v1030
    %v1046 = vadd.f32 %v1011, %v1030
    %v1047 = vadd.f32 %v1012, %v1030
    %v1048 = vadd.f32 %v1013, %v1030
    %v1049 = vadd.f32 %v1014, %v1030
    %v1050 = vadd.f32 %v1015, %v1030
    %v1051 = vadd.f32 %v1016, %v1030
    %v1052 = vadd.f32 %v1017, %v1030
    %v1053 = vadd.f32 %v1018, %v1030
    %v1054 = vadd.f32 %v1019, %v1030
    %v1055 = vadd.f32 %v1020, %v1030
    %v1056 = vadd.f32 %v1021, %v1030
    %v1057 = vadd.f32 %v1022, %v1030
    %v1058 = vadd.f32 %v1023, %v1030
    %v1059 = vadd.f32 %v1024, %v1030
    %v1060 = vmax.f32 %v1032, 0.0
    %v1061 = vmax.f32 %v1033, 0.0
    %v1062 = vmax.f32 %v1034, 0.0
    %v1063 = vmax.f32 %v1035, 0.0
    %v1064 = vmax.f32 %v1036, 0.0
    %v1065 = vmax.f32 %v1037, 0.0
    %v1066 = vmax.f32 %v1038, 0.0
    %v1067 = vmax.f32 %v1039, 0.0
    %v1068 = vmax.f32 %v1040, 0.0
    %v1069 = vmax.f32 %v1041, 0.0
    %v1070 = vmax.f32 %v1042, 0.0
    %v1071 = vmax.f32 %v1043, 0.0
    %v1072 = vmax.f32 %v1044, 0.0
    %v1073 = vmax.f32 %v1045, 0.0
    %v1074 = vmax.f32 %v1046, 0.0
    %v1075 = vmax.f32 %v1047, 0.0
    %v1076 = vmax.f32 %v1048, 0.0
    %v1077 = vmax.f32 %v1049, 0.0
    %v1078 = vmax.f32 %v1050, 0.0
    %v1079 = vmax.f32 %v1051, 0.0
    %v1080 = vmax.f32 %v1052, 0.0
    %v1081 = vmax.f32 %v1053, 0.0
    %v1082 = vmax.f32 %v1054, 0.0
    %v1083 = vmax.f32 %v1055, 0.0
    %v1084 = vmax.f32 %v1056, 0.0
    %v1085 = vmax.f32 %v1057, 0.0
    %v1086 = vmax.f32 %v1058, 0.0
    %v1087 = vmax.f32 %v1059, 0.0
    %v1088 = vpack.c.bf16 %v1061, %v1060
    %v1089 = vpack.c.bf16 %v1063, %v1062
    %v1090 = vpack.c.bf16 %v1065, %v1064
    %v1091 = vpack.c.bf16 %v1067, %v1066
    %v1092 = vpack.c.bf16 %v1069, %v1068
    %v1093 = vpack.c.bf16 %v1071, %v1070
    %v1094 = vpack.c.bf16 %v1073, %v1072
    %v1095 = vpack.c.bf16 %v1075, %v1074
    %v1096 = vpack.c.bf16 %v1077, %v1076
    %v1097 = vpack.c.bf16 %v1079, %v1078
    %v1098 = vpack.c.bf16 %v1081, %v1080
    %v1099 = vpack.c.bf16 %v1083, %v1082
    %v1100 = vpack.c.bf16 %v1085, %v1084
    %v1101 = vpack.c.bf16 %v1087, %v1086
    %v1102 = vld [vmem:[%s2] sm:$0xff]
    %v1103 = vld [vmem:[%s2 + $0x8] sm:$0xff]
    %v1104 = vld [vmem:[%s2 + $0x10] sm:$0xff]
    %v1105 = vld [vmem:[%s2 + $0x18] sm:$0xff]
    %v1106 = vld [vmem:[%s2 + $0x20] sm:$0xff]
    %v1107 = vld [vmem:[%s2 + $0x28] sm:$0xff]
    %v1108 = vld [vmem:[%s2 + $0x30] sm:$0xff]
    %v1109 = vld [vmem:[%s2 + $0x38] sm:$0xff]
    %v1110 = vld [vmem:[%s2 + $0x40] sm:$0xff]
    %v1111 = vld [vmem:[%s2 + $0x48] sm:$0xff]
    %v1112 = vld [vmem:[%s2 + $0x50] sm:$0xff]
    %v1113 = vld [vmem:[%s2 + $0x58] sm:$0xff]
    %v1114 = vld [vmem:[%s2 + $0x60] sm:$0xff]
    %v1115 = vld [vmem:[%s2 + $0x68] sm:$0xff]
    %v1116 = vld [vmem:[%s2 + $0x70] sm:$0xff]
    %v1117 = vld [vmem:[%s2 + $0x78] sm:$0xff]
    %v1118 = vld [vmem:[%s2 + $0x80] sm:$0xff]
    %v1119 = vld [vmem:[%s2 + $0x88] sm:$0xff]
    %v1120 = vld [vmem:[%s2 + $0x90] sm:$0xff]
    %v1121 = vld [vmem:[%s2 + $0x98] sm:$0xff]
    %v1122 = vld [vmem:[%s2 + $0xa0] sm:$0xff]
    %v1123 = vld [vmem:[%s2 + $0xa8] sm:$0xff]
    %v1124 = vld [vmem:[%s2 + $0xb0] sm:$0xff]
    %v1125 = vld [vmem:[%s2 + $0xb8] sm:$0xff]
    %v1126 = vld [vmem:[%s2 + $0xc0] sm:$0xff]
    %v1127 = vld [vmem:[%s2 + $0xc8] sm:$0xff]
    %v1128 = vld [vmem:[%s2 + $0xd0] sm:$0xff]
    %v1129 = vld [vmem:[%s2 + $0xd8] sm:$0xff]
    %v1130 = vld [vmem:[%s2 + $0xe0] sm:$0xff]
    %v1131 = vld [vmem:[%s2 + $0xe8] sm:$0xff]
    %v1132 = vld [vmem:[%s2 + $0xf0] sm:$0xff]
    %v1133 = vld [vmem:[%s2 + $0xf8] sm:$0xff]
    %v1134 = vld [vmem:[%s2 + $0x100] sm:$0xff]
    %v1135 = vld [vmem:[%s2 + $0x108] sm:$0xff]
    %v1136 = vld [vmem:[%s2 + $0x110] sm:$0xff]
    %v1137 = vld [vmem:[%s2 + $0x118] sm:$0xff]
    %v1138 = vld [vmem:[%s2 + $0x120] sm:$0xff]
    %v1139 = vld [vmem:[%s2 + $0x128] sm:$0xff]
    %v1140 = vld [vmem:[%s2 + $0x130] sm:$0xff]
    %v1141 = vld [vmem:[%s2 + $0x138] sm:$0xff]
    %v1142 = vld [vmem:[%s2 + $0x140] sm:$0xff]
    %v1143 = vld [vmem:[%s2 + $0x148] sm:$0xff]
    %v1144 = vld [vmem:[%s2 + $0x150] sm:$0xff]
    %v1145 = vld [vmem:[%s2 + $0x158] sm:$0xff]
    %v1146 = vld [vmem:[%s2 + $0x160] sm:$0xff]
    %v1147 = vld [vmem:[%s2 + $0x168] sm:$0xff]
    %v1148 = vld [vmem:[%s2 + $0x170] sm:$0xff]
    %v1149 = vld [vmem:[%s2 + $0x178] sm:$0xff]
    %v1198 = vunpack.c.l.b16 %v1102
    %v1199 = vunpack.c.h.b16 %v1102
    %v1200 = vunpack.c.l.b16 %v1103
    %v1201 = vunpack.c.h.b16 %v1103
    %v1202 = vunpack.c.l.b16 %v1104
    %v1203 = vunpack.c.h.b16 %v1104
    %v1204 = vunpack.c.l.b16 %v1105
    %v1205 = vunpack.c.h.b16 %v1105
    %v1206 = vunpack.c.l.b16 %v1106
    %v1207 = vunpack.c.h.b16 %v1106
    %v1208 = vunpack.c.l.b16 %v1107
    %v1209 = vunpack.c.h.b16 %v1107
    %v1210 = vunpack.c.l.b16 %v1108
    %v1211 = vunpack.c.h.b16 %v1108
    %v1212 = vunpack.c.l.b16 %v1109
    %v1213 = vunpack.c.h.b16 %v1109
    %v1214 = vunpack.c.l.b16 %v1110
    %v1215 = vunpack.c.h.b16 %v1110
    %v1216 = vunpack.c.l.b16 %v1111
    %v1217 = vunpack.c.h.b16 %v1111
    %v1218 = vunpack.c.l.b16 %v1112
    %v1219 = vunpack.c.h.b16 %v1112
    %v1220 = vunpack.c.l.b16 %v1113
    %v1221 = vunpack.c.h.b16 %v1113
    %v1222 = vunpack.c.l.b16 %v1114
    %v1223 = vunpack.c.h.b16 %v1114
    %v1224 = vunpack.c.l.b16 %v1115
    %v1225 = vunpack.c.h.b16 %v1115
    %v1226 = vunpack.c.l.b16 %v1116
    %v1227 = vunpack.c.h.b16 %v1116
    %v1228 = vunpack.c.l.b16 %v1117
    %v1229 = vunpack.c.h.b16 %v1117
    %v1230 = vunpack.c.l.b16 %v1118
    %v1231 = vunpack.c.h.b16 %v1118
    %v1232 = vunpack.c.l.b16 %v1119
    %v1233 = vunpack.c.h.b16 %v1119
    %v1234 = vunpack.c.l.b16 %v1120
    %v1235 = vunpack.c.h.b16 %v1120
    %v1236 = vunpack.c.l.b16 %v1121
    %v1237 = vunpack.c.h.b16 %v1121
    %v1238 = vunpack.c.l.b16 %v1122
    %v1239 = vunpack.c.h.b16 %v1122
    %v1240 = vunpack.c.l.b16 %v1123
    %v1241 = vunpack.c.h.b16 %v1123
    %v1242 = vunpack.c.l.b16 %v1124
    %v1243 = vunpack.c.h.b16 %v1124
    %v1244 = vunpack.c.l.b16 %v1125
    %v1245 = vunpack.c.h.b16 %v1125
    %v1246 = vunpack.c.l.b16 %v1126
    %v1247 = vunpack.c.h.b16 %v1126
    %v1248 = vunpack.c.l.b16 %v1127
    %v1249 = vunpack.c.h.b16 %v1127
    %v1250 = vunpack.c.l.b16 %v1128
    %v1251 = vunpack.c.h.b16 %v1128
    %v1252 = vunpack.c.l.b16 %v1129
    %v1253 = vunpack.c.h.b16 %v1129
    %v1254 = vunpack.c.l.b16 %v1130
    %v1255 = vunpack.c.h.b16 %v1130
    %v1256 = vunpack.c.l.b16 %v1131
    %v1257 = vunpack.c.h.b16 %v1131
    %v1258 = vunpack.c.l.b16 %v1132
    %v1259 = vunpack.c.h.b16 %v1132
    %v1260 = vunpack.c.l.b16 %v1133
    %v1261 = vunpack.c.h.b16 %v1133
    %v1262 = vunpack.c.l.b16 %v1134
    %v1263 = vunpack.c.h.b16 %v1134
    %v1264 = vunpack.c.l.b16 %v1135
    %v1265 = vunpack.c.h.b16 %v1135
    %v1266 = vunpack.c.l.b16 %v1136
    %v1267 = vunpack.c.h.b16 %v1136
    %v1268 = vunpack.c.l.b16 %v1137
    %v1269 = vunpack.c.h.b16 %v1137
    %v1270 = vunpack.c.l.b16 %v1138
    %v1271 = vunpack.c.h.b16 %v1138
    %v1272 = vunpack.c.l.b16 %v1139
    %v1273 = vunpack.c.h.b16 %v1139
    %v1274 = vunpack.c.l.b16 %v1140
    %v1275 = vunpack.c.h.b16 %v1140
    %v1276 = vunpack.c.l.b16 %v1141
    %v1277 = vunpack.c.h.b16 %v1141
    %v1278 = vunpack.c.l.b16 %v1142
    %v1279 = vunpack.c.h.b16 %v1142
    %v1280 = vunpack.c.l.b16 %v1143
    %v1281 = vunpack.c.h.b16 %v1143
    %v1282 = vunpack.c.l.b16 %v1144
    %v1283 = vunpack.c.h.b16 %v1144
    %v1284 = vunpack.c.l.b16 %v1145
    %v1285 = vunpack.c.h.b16 %v1145
    %v1286 = vunpack.c.l.b16 %v1146
    %v1287 = vunpack.c.h.b16 %v1146
    %v1288 = vunpack.c.l.b16 %v1147
    %v1289 = vunpack.c.h.b16 %v1147
    %v1290 = vunpack.c.l.b16 %v1148
    %v1291 = vunpack.c.h.b16 %v1148
    %v1292 = vunpack.c.l.b16 %v1149
    %v1293 = vunpack.c.h.b16 %v1149
    %v1294 = vpack.c.b16 %v1200, %v1198
    %v1295 = vpack.c.b16 %v1201, %v1199
    %v1296 = vpack.c.b16 %v1204, %v1202
    %v1297 = vpack.c.b16 %v1205, %v1203
    %v1298 = vpack.c.b16 %v1208, %v1206
    %v1299 = vpack.c.b16 %v1209, %v1207
    %v1300 = vpack.c.b16 %v1212, %v1210
    %v1301 = vpack.c.b16 %v1213, %v1211
    %v1302 = vpack.c.b16 %v1216, %v1214
    %v1303 = vpack.c.b16 %v1217, %v1215
    %v1304 = vpack.c.b16 %v1220, %v1218
    %v1305 = vpack.c.b16 %v1221, %v1219
    %v1306 = vpack.c.b16 %v1224, %v1222
    %v1307 = vpack.c.b16 %v1225, %v1223
    %v1308 = vpack.c.b16 %v1228, %v1226
    %v1309 = vpack.c.b16 %v1229, %v1227
    %v1310 = vpack.c.b16 %v1232, %v1230
    %v1311 = vpack.c.b16 %v1233, %v1231
    %v1312 = vpack.c.b16 %v1236, %v1234
    %v1313 = vpack.c.b16 %v1237, %v1235
    %v1314 = vpack.c.b16 %v1240, %v1238
    %v1315 = vpack.c.b16 %v1241, %v1239
    %v1316 = vpack.c.b16 %v1244, %v1242
    %v1317 = vpack.c.b16 %v1245, %v1243
    %v1318 = vpack.c.b16 %v1248, %v1246
    %v1319 = vpack.c.b16 %v1249, %v1247
    %v1320 = vpack.c.b16 %v1252, %v1250
    %v1321 = vpack.c.b16 %v1253, %v1251
    %v1322 = vpack.c.b16 %v1256, %v1254
    %v1323 = vpack.c.b16 %v1257, %v1255
    %v1324 = vpack.c.b16 %v1260, %v1258
    %v1325 = vpack.c.b16 %v1261, %v1259
    %v1326 = vpack.c.b16 %v1264, %v1262
    %v1327 = vpack.c.b16 %v1265, %v1263
    %v1328 = vpack.c.b16 %v1268, %v1266
    %v1329 = vpack.c.b16 %v1269, %v1267
    %v1330 = vpack.c.b16 %v1272, %v1270
    %v1331 = vpack.c.b16 %v1273, %v1271
    %v1332 = vpack.c.b16 %v1276, %v1274
    %v1333 = vpack.c.b16 %v1277, %v1275
    %v1334 = vpack.c.b16 %v1280, %v1278
    %v1335 = vpack.c.b16 %v1281, %v1279
    %v1336 = vpack.c.b16 %v1284, %v1282
    %v1337 = vpack.c.b16 %v1285, %v1283
    %v1338 = vpack.c.b16 %v1288, %v1286
    %v1339 = vpack.c.b16 %v1289, %v1287
    %v1340 = vpack.c.b16 %v1292, %v1290
    %v1341 = vpack.c.b16 %v1293, %v1291
    %1390 = vmatprep.subr.bf16.mxu0 %v1309
    %1391 = vmatpush1.bf16.msra.mxu0 %v1308
    %1392 = vmatprep.subr.bf16.mxu0 %v1307
    %1393 = vmatpush1.bf16.msra.mxu0 %v1306
    %1394 = vmatprep.subr.bf16.mxu0 %v1305
    %1395 = vmatpush1.bf16.msra.mxu0 %v1304
    %1396 = vmatprep.subr.bf16.mxu0 %v1303
    %1397 = vmatpush1.bf16.msra.mxu0 %v1302
    %1398 = vmatprep.subr.bf16.mxu0 %v1301
    %1399 = vmatpush1.bf16.msra.mxu0 %v1300
    %1400 = vmatprep.subr.bf16.mxu0 %v1299
    %1401 = vmatpush1.bf16.msra.mxu0 %v1298
    %1402 = vmatprep.subr.bf16.mxu0 %v1297
    %1403 = vmatpush1.bf16.msra.mxu0 %v1296
    %1404 = vmatprep.subr.bf16.mxu0 %v1295
    %1405 = vmatpush1.bf16.msra.mxu0 %v1294
    %1406 = vmatprep.subr.bf16.mxu0 %v1325
    %1407 = vmatpush2.bf16.msra.mxu0 %v1324
    %1408 = vmatprep.subr.bf16.mxu0 %v1323
    %1409 = vmatpush2.bf16.msra.mxu0 %v1322
    %1410 = vmatprep.subr.bf16.mxu0 %v1321
    %1411 = vmatpush2.bf16.msra.mxu0 %v1320
    %1412 = vmatprep.subr.bf16.mxu0 %v1319
    %1413 = vmatpush2.bf16.msra.mxu0 %v1318
    %1414 = vmatprep.subr.bf16.mxu0 %v1317
    %1415 = vmatpush2.bf16.msra.mxu0 %v1316
    %1416 = vmatprep.subr.bf16.mxu0 %v1315
    %1417 = vmatpush2.bf16.msra.mxu0 %v1314
    %1418 = vmatprep.subr.bf16.mxu0 %v1313
    %1419 = vmatpush2.bf16.msra.mxu0 %v1312
    %1420 = vmatprep.subr.bf16.mxu0 %v1311
    %1421 = vmatpush2.bf16.msra.mxu0 %v1310
    %1422 = vmatprep.mubr.bf16.mxu0 %v1089
    %1423 = vmatmul.mubr.bf16.gmra.mxu0 %v1088
    %v1424 = vpop.f32.mrf.mxu0
    %v1425 = vadd.f32 0.0, %v1424
    %v1426 = vpop.f32.mrf.mxu0
    %v1427 = vadd.f32 0.0, %v1426
    %v1428 = vpop.f32.mrf.mxu0
    %v1429 = vadd.f32 0.0, %v1428
    %v1430 = vpop.f32.mrf.mxu0
    %v1431 = vadd.f32 0.0, %v1430
    %1432 = vmatprep.mubr.bf16.mxu0 %v1090
    %1433 = vmatmul.mubr.bf16.gmra.mxu0 %v1089
    %v1434 = vpop.f32.mrf.mxu0
    %v1435 = vadd.f32 0.0, %v1434
    %v1436 = vpop.f32.mrf.mxu0
    %v1437 = vadd.f32 0.0, %v1436
    %v1438 = vpop.f32.mrf.mxu0
    %v1439 = vadd.f32 0.0, %v1438
    %v1440 = vpop.f32.mrf.mxu0
    %v1441 = vadd.f32 0.0, %v1440
    %1442 = vmatprep.mubr.bf16.mxu0 %v1091
    %1443 = vmatmul.mubr.bf16.gmra.mxu0 %v1090
    %v1444 = vpop.f32.mrf.mxu0
    %v1445 = vadd.f32 0.0, %v1444
    %v1446 = vpop.f32.mrf.mxu0
    %v1447 = vadd.f32 0.0, %v1446
    %v1448 = vpop.f32.mrf.mxu0
    %v1449 = vadd.f32 0.0, %v1448
    %v1450 = vpop.f32.mrf.mxu0
    %v1451 = vadd.f32 0.0, %v1450
    %1452 = vmatprep.mubr.bf16.mxu0 %v1092
    %1453 = vmatmul.mubr.bf16.gmra.mxu0 %v1091
    %v1454 = vpop.f32.mrf.mxu0
    %v1455 = vadd.f32 0.0, %v1454
    %v1456 = vpop.f32.mrf.mxu0
    %v1457 = vadd.f32 0.0, %v1456
    %v1458 = vpop.f32.mrf.mxu0
    %v1459 = vadd.f32 0.0, %v1458
    %v1460 = vpop.f32.mrf.mxu0
    %v1461 = vadd.f32 0.0, %v1460
    %1462 = vmatprep.mubr.bf16.mxu0 %v1093
    %1463 = vmatmul.mubr.bf16.gmra.mxu0 %v1092
    %v1464 = vpop.f32.mrf.mxu0
    %v1465 = vadd.f32 0.0, %v1464
    %v1466 = vpop.f32.mrf.mxu0
    %v1467 = vadd.f32 0.0, %v1466
    %v1468 = vpop.f32.mrf.mxu0
    %v1469 = vadd.f32 0.0, %v1468
    %v1470 = vpop.f32.mrf.mxu0
    %v1471 = vadd.f32 0.0, %v1470
    %1472 = vmatprep.mubr.bf16.mxu0 %v1094
    %1473 = vmatmul.mubr.bf16.gmra.mxu0 %v1093
    %v1474 = vpop.f32.mrf.mxu0
    %v1475 = vadd.f32 0.0, %v1474
    %v1476 = vpop.f32.mrf.mxu0
    %v1477 = vadd.f32 0.0, %v1476
    %v1478 = vpop.f32.mrf.mxu0
    %v1479 = vadd.f32 0.0, %v1478
    %v1480 = vpop.f32.mrf.mxu0
    %v1481 = vadd.f32 0.0, %v1480
    %1482 = vmatprep.mubr.bf16.mxu0 %v1095
    %1483 = vmatmul.mubr.bf16.gmra.mxu0 %v1094
    %v1484 = vpop.f32.mrf.mxu0
    %v1485 = vadd.f32 0.0, %v1484
    %v1486 = vpop.f32.mrf.mxu0
    %v1487 = vadd.f32 0.0, %v1486
    %v1488 = vpop.f32.mrf.mxu0
    %v1489 = vadd.f32 0.0, %v1488
    %v1490 = vpop.f32.mrf.mxu0
    %v1491 = vadd.f32 0.0, %v1490
    %1492 = vmatprep.mubr.bf16.mxu0 %v1096
    %1493 = vmatmul.mubr.bf16.gmra.mxu0 %v1095
    %v1494 = vpop.f32.mrf.mxu0
    %v1495 = vadd.f32 0.0, %v1494
    %v1496 = vpop.f32.mrf.mxu0
    %v1497 = vadd.f32 0.0, %v1496
    %v1498 = vpop.f32.mrf.mxu0
    %v1499 = vadd.f32 0.0, %v1498
    %v1500 = vpop.f32.mrf.mxu0
    %v1501 = vadd.f32 0.0, %v1500
    %1502 = vmatprep.mubr.bf16.mxu0 %v1097
    %1503 = vmatmul.mubr.bf16.gmra.mxu0 %v1096
    %v1504 = vpop.f32.mrf.mxu0
    %v1505 = vadd.f32 0.0, %v1504
    %v1506 = vpop.f32.mrf.mxu0
    %v1507 = vadd.f32 0.0, %v1506
    %v1508 = vpop.f32.mrf.mxu0
    %v1509 = vadd.f32 0.0, %v1508
    %v1510 = vpop.f32.mrf.mxu0
    %v1511 = vadd.f32 0.0, %v1510
    %1512 = vmatprep.mubr.bf16.mxu0 %v1098
    %1513 = vmatmul.mubr.bf16.gmra.mxu0 %v1097
    %v1514 = vpop.f32.mrf.mxu0
    %v1515 = vadd.f32 0.0, %v1514
    %v1516 = vpop.f32.mrf.mxu0
    %v1517 = vadd.f32 0.0, %v1516
    %v1518 = vpop.f32.mrf.mxu0
    %v1519 = vadd.f32 0.0, %v1518
    %v1520 = vpop.f32.mrf.mxu0
    %v1521 = vadd.f32 0.0, %v1520
    %1522 = vmatprep.mubr.bf16.mxu0 %v1099
    %1523 = vmatmul.mubr.bf16.gmra.mxu0 %v1098
    %v1524 = vpop.f32.mrf.mxu0
    %v1525 = vadd.f32 0.0, %v1524
    %v1526 = vpop.f32.mrf.mxu0
    %v1527 = vadd.f32 0.0, %v1526
    %v1528 = vpop.f32.mrf.mxu0
    %v1529 = vadd.f32 0.0, %v1528
    %v1530 = vpop.f32.mrf.mxu0
    %v1531 = vadd.f32 0.0, %v1530
    %1532 = vmatprep.mubr.bf16.mxu0 %v1100
    %1533 = vmatmul.mubr.bf16.gmra.mxu0 %v1099
    %v1534 = vpop.f32.mrf.mxu0
    %v1535 = vadd.f32 0.0, %v1534
    %v1536 = vpop.f32.mrf.mxu0
    %v1537 = vadd.f32 0.0, %v1536
    %v1538 = vpop.f32.mrf.mxu0
    %v1539 = vadd.f32 0.0, %v1538
    %v1540 = vpop.f32.mrf.mxu0
    %v1541 = vadd.f32 0.0, %v1540
    %1542 = vdwg.mxu0
    %1543 = vmatprep.subr.bf16.mxu0 %v1341
    %1544 = vmatpush1.bf16.msra.mxu0 %v1340
    %1545 = vmatprep.subr.bf16.mxu0 %v1339
    %1546 = vmatpush1.bf16.msra.mxu0 %v1338
    %1547 = vmatprep.subr.bf16.mxu0 %v1337
    %1548 = vmatpush1.bf16.msra.mxu0 %v1336
    %1549 = vmatprep.subr.bf16.mxu0 %v1335
    %1550 = vmatpush1.bf16.msra.mxu0 %v1334
    %1551 = vmatprep.subr.bf16.mxu0 %v1333
    %1552 = vmatpush1.bf16.msra.mxu0 %v1332
    %1553 = vmatprep.subr.bf16.mxu0 %v1331
    %1554 = vmatpush1.bf16.msra.mxu0 %v1330
    %1555 = vmatprep.subr.bf16.mxu0 %v1329
    %1556 = vmatpush1.bf16.msra.mxu0 %v1328
    %1557 = vmatprep.subr.bf16.mxu0 %v1327
    %1558 = vmatpush1.bf16.msra.mxu0 %v1326
    %1559 = vmatprep.subr.bf16.mxu0 0
    %1560 = vmatpush2.bf16.msra.mxu0 0
    %1561 = vmatprep.subr.bf16.mxu0 0
    %1562 = vmatpush2.bf16.msra.mxu0 0
    %1563 = vmatprep.subr.bf16.mxu0 0
    %1564 = vmatpush2.bf16.msra.mxu0 0
    %1565 = vmatprep.subr.bf16.mxu0 0
    %1566 = vmatpush2.bf16.msra.mxu0 0
    %1567 = vmatprep.subr.bf16.mxu0 0
    %1568 = vmatpush2.bf16.msra.mxu0 0
    %1569 = vmatprep.subr.bf16.mxu0 0
    %1570 = vmatpush2.bf16.msra.mxu0 0
    %1571 = vmatprep.subr.bf16.mxu0 0
    %1572 = vmatpush2.bf16.msra.mxu0 0
    %1573 = vmatprep.subr.bf16.mxu0 0
    %1574 = vmatpush2.bf16.msra.mxu0 0
    %1575 = vmatprep.mubr.bf16.mxu0 0
    %1576 = vmatmul.mubr.bf16.gmra.mxu0 %v1090
    %v1577 = vpop.f32.mrf.mxu0
    %v1578 = vadd.f32 %v1425, %v1577
    %v1579 = vpop.f32.mrf.mxu0
    %v1580 = vadd.f32 %v1427, %v1579
    %v1581 = vpop.f32.mrf.mxu0
    %v1582 = vadd.f32 %v1429, %v1581
    %v1583 = vpop.f32.mrf.mxu0
    %v1584 = vadd.f32 %v1431, %v1583
    %1585 = vmatprep.mubr.bf16.mxu0 0
    %1586 = vmatmul.mubr.bf16.gmra.mxu0 %v1091
    %v1587 = vpop.f32.mrf.mxu0
    %v1588 = vadd.f32 %v1435, %v1587
    %v1589 = vpop.f32.mrf.mxu0
    %v1590 = vadd.f32 %v1437, %v1589
    %v1591 = vpop.f32.mrf.mxu0
    %v1592 = vadd.f32 %v1439, %v1591
    %v1593 = vpop.f32.mrf.mxu0
    %v1594 = vadd.f32 %v1441, %v1593
    %1595 = vmatprep.mubr.bf16.mxu0 0
    %1596 = vmatmul.mubr.bf16.gmra.mxu0 %v1092
    %v1597 = vpop.f32.mrf.mxu0
    %v1598 = vadd.f32 %v1445, %v1597
    %v1599 = vpop.f32.mrf.mxu0
    %v1600 = vadd.f32 %v1447, %v1599
    %v1601 = vpop.f32.mrf.mxu0
    %v1602 = vadd.f32 %v1449, %v1601
    %v1603 = vpop.f32.mrf.mxu0
    %v1604 = vadd.f32 %v1451, %v1603
    %1605 = vmatprep.mubr.bf16.mxu0 0
    %1606 = vmatmul.mubr.bf16.gmra.mxu0 %v1093
    %v1607 = vpop.f32.mrf.mxu0
    %v1608 = vadd.f32 %v1455, %v1607
    %v1609 = vpop.f32.mrf.mxu0
    %v1610 = vadd.f32 %v1457, %v1609
    %v1611 = vpop.f32.mrf.mxu0
    %v1612 = vadd.f32 %v1459, %v1611
    %v1613 = vpop.f32.mrf.mxu0
    %v1614 = vadd.f32 %v1461, %v1613
    %1615 = vmatprep.mubr.bf16.mxu0 0
    %1616 = vmatmul.mubr.bf16.gmra.mxu0 %v1094
    %v1617 = vpop.f32.mrf.mxu0
    %v1618 = vadd.f32 %v1465, %v1617
    %v1619 = vpop.f32.mrf.mxu0
    %v1620 = vadd.f32 %v1467, %v1619
    %v1621 = vpop.f32.mrf.mxu0
    %v1622 = vadd.f32 %v1469, %v1621
    %v1623 = vpop.f32.mrf.mxu0
    %v1624 = vadd.f32 %v1471, %v1623
    %1625 = vmatprep.mubr.bf16.mxu0 0
    %1626 = vmatmul.mubr.bf16.gmra.mxu0 %v1095
    %v1627 = vpop.f32.mrf.mxu0
    %v1628 = vadd.f32 %v1475, %v1627
    %v1629 = vpop.f32.mrf.mxu0
    %v1630 = vadd.f32 %v1477, %v1629
    %v1631 = vpop.f32.mrf.mxu0
    %v1632 = vadd.f32 %v1479, %v1631
    %v1633 = vpop.f32.mrf.mxu0
    %v1634 = vadd.f32 %v1481, %v1633
    %1635 = vmatprep.mubr.bf16.mxu0 0
    %1636 = vmatmul.mubr.bf16.gmra.mxu0 %v1096
    %v1637 = vpop.f32.mrf.mxu0
    %v1638 = vadd.f32 %v1485, %v1637
    %v1639 = vpop.f32.mrf.mxu0
    %v1640 = vadd.f32 %v1487, %v1639
    %v1641 = vpop.f32.mrf.mxu0
    %v1642 = vadd.f32 %v1489, %v1641
    %v1643 = vpop.f32.mrf.mxu0
    %v1644 = vadd.f32 %v1491, %v1643
    %1645 = vmatprep.mubr.bf16.mxu0 0
    %1646 = vmatmul.mubr.bf16.gmra.mxu0 %v1097
    %v1647 = vpop.f32.mrf.mxu0
    %v1648 = vadd.f32 %v1495, %v1647
    %v1649 = vpop.f32.mrf.mxu0
    %v1650 = vadd.f32 %v1497, %v1649
    %v1651 = vpop.f32.mrf.mxu0
    %v1652 = vadd.f32 %v1499, %v1651
    %v1653 = vpop.f32.mrf.mxu0
    %v1654 = vadd.f32 %v1501, %v1653
    %1655 = vmatprep.mubr.bf16.mxu0 0
    %1656 = vmatmul.mubr.bf16.gmra.mxu0 %v1098
    %v1657 = vpop.f32.mrf.mxu0
    %v1658 = vadd.f32 %v1505, %v1657
    %v1659 = vpop.f32.mrf.mxu0
    %v1660 = vadd.f32 %v1507, %v1659
    %v1661 = vpop.f32.mrf.mxu0
    %v1662 = vadd.f32 %v1509, %v1661
    %v1663 = vpop.f32.mrf.mxu0
    %v1664 = vadd.f32 %v1511, %v1663
    %1665 = vmatprep.mubr.bf16.mxu0 0
    %1666 = vmatmul.mubr.bf16.gmra.mxu0 %v1099
    %v1667 = vpop.f32.mrf.mxu0
    %v1668 = vadd.f32 %v1515, %v1667
    %v1669 = vpop.f32.mrf.mxu0
    %v1670 = vadd.f32 %v1517, %v1669
    %v1671 = vpop.f32.mrf.mxu0
    %v1672 = vadd.f32 %v1519, %v1671
    %v1673 = vpop.f32.mrf.mxu0
    %v1674 = vadd.f32 %v1521, %v1673
    %1675 = vmatprep.mubr.bf16.mxu0 0
    %1676 = vmatmul.mubr.bf16.gmra.mxu0 %v1100
    %v1677 = vpop.f32.mrf.mxu0
    %v1678 = vadd.f32 %v1525, %v1677
    %v1679 = vpop.f32.mrf.mxu0
    %v1680 = vadd.f32 %v1527, %v1679
    %v1681 = vpop.f32.mrf.mxu0
    %v1682 = vadd.f32 %v1529, %v1681
    %v1683 = vpop.f32.mrf.mxu0
    %v1684 = vadd.f32 %v1531, %v1683
    %1685 = vmatprep.mubr.bf16.mxu0 0
    %1686 = vmatmul.mubr.bf16.gmra.mxu0 %v1101
    %v1687 = vpop.f32.mrf.mxu0
    %v1688 = vadd.f32 %v1535, %v1687
    %v1689 = vpop.f32.mrf.mxu0
    %v1690 = vadd.f32 %v1537, %v1689
    %v1691 = vpop.f32.mrf.mxu0
    %v1692 = vadd.f32 %v1539, %v1691
    %v1693 = vpop.f32.mrf.mxu0
    %v1694 = vadd.f32 %v1541, %v1693
    %1695 = vdwg.mxu0
    %v1696 = vmax.f32 %v1578, %v1588
    %v1697 = vmax.f32 %v1580, %v1590
    %v1698 = vmax.f32 %v1582, %v1592
    %v1699 = vmax.f32 %v1584, %v1594
    %v1700 = vmax.f32 %v1598, %v1608
    %v1701 = vmax.f32 %v1600, %v1610
    %v1702 = vmax.f32 %v1602, %v1612
    %v1703 = vmax.f32 %v1604, %v1614
    %v1704 = vmax.f32 %v1618, %v1628
    %v1705 = vmax.f32 %v1620, %v1630
    %v1706 = vmax.f32 %v1622, %v1632
    %v1707 = vmax.f32 %v1624, %v1634
    %v1708 = vmax.f32 %v1638, %v1648
    %v1709 = vmax.f32 %v1640, %v1650
    %v1710 = vmax.f32 %v1642, %v1652
    %v1711 = vmax.f32 %v1644, %v1654
    %v1712 = vmax.f32 %v1658, %v1668
    %v1713 = vmax.f32 %v1660, %v1670
    %v1714 = vmax.f32 %v1662, %v1672
    %v1715 = vmax.f32 %v1664, %v1674
    %v1716 = vmax.f32 %v1678, %v1688
    %v1717 = vmax.f32 %v1680, %v1690
    %v1718 = vmax.f32 %v1682, %v1692
    %v1719 = vmax.f32 %v1684, %v1694
    %v1720 = vmax.f32 %v1696, %v1697
    %v1721 = vmax.f32 %v1698, %v1699
    %v1722 = vmax.f32 %v1700, %v1701
    %v1723 = vmax.f32 %v1702, %v1703
    %v1724 = vmax.f32 %v1704, %v1705
    %v1725 = vmax.f32 %v1706, %v1707
    %v1726 = vmax.f32 %v1708, %v1709
    %v1727 = vmax.f32 %v1710, %v1711
    %v1728 = vmax.f32 %v1712, %v1713
    %v1729 = vmax.f32 %v1714, %v1715
    %v1730 = vmax.f32 %v1716, %v1717
    %v1731 = vmax.f32 %v1718, %v1719
    %v1732 = vld [vmem:[%s4] sm:$0x1]
    %v1734 = vlaneseq
    %v1735 = vshrl.u32 %v1734, 7
    %v1736 = vsub.s32 0, %v1735
    %v1737 = vrot.slane %v1732, %v1736
    %v1739 = vadd.f32 %v1720, %v1737
    %v1740 = vadd.f32 %v1721, %v1737
    %v1741 = vadd.f32 %v1722, %v1737
    %v1742 = vadd.f32 %v1723, %v1737
    %v1743 = vadd.f32 %v1724, %v1737
    %v1744 = vadd.f32 %v1725, %v1737
    %v1745 = vadd.f32 %v1726, %v1737
    %v1746 = vadd.f32 %v1727, %v1737
    %v1747 = vadd.f32 %v1728, %v1737
    %v1748 = vadd.f32 %v1729, %v1737
    %v1749 = vadd.f32 %v1730, %v1737
    %v1750 = vadd.f32 %v1731, %v1737
    %v1751 = vmax.f32 %v1739, 0.0
    %v1752 = vmax.f32 %v1740, 0.0
    %v1753 = vmax.f32 %v1741, 0.0
    %v1754 = vmax.f32 %v1742, 0.0
    %v1755 = vmax.f32 %v1743, 0.0
    %v1756 = vmax.f32 %v1744, 0.0
    %v1757 = vmax.f32 %v1745, 0.0
    %v1758 = vmax.f32 %v1746, 0.0
    %v1759 = vmax.f32 %v1747, 0.0
    %v1760 = vmax.f32 %v1748, 0.0
    %v1761 = vmax.f32 %v1749, 0.0
    %v1762 = vmax.f32 %v1750, 0.0
    %v1763 = vpack.c.bf16 %v1752, %v1751
    %v1764 = vpack.c.bf16 %v1754, %v1753
    %v1765 = vpack.c.bf16 %v1756, %v1755
    %v1766 = vpack.c.bf16 %v1758, %v1757
    %v1767 = vpack.c.bf16 %v1760, %v1759
    %v1768 = vpack.c.bf16 %v1762, %v1761
    %v1769 = vld [vmem:[%s5] sm:$0xf]
    %v1770 = vld [vmem:[%s5 + $0x4] sm:$0xf]
    %v1771 = vld [vmem:[%s5 + $0x8] sm:$0xf]
    %v1772 = vld [vmem:[%s5 + $0xc] sm:$0xf]
    %v1773 = vld [vmem:[%s5 + $0x10] sm:$0xf]
    %v1774 = vld [vmem:[%s5 + $0x14] sm:$0xf]
    %v1775 = vld [vmem:[%s5 + $0x18] sm:$0xf]
    %v1776 = vld [vmem:[%s5 + $0x1c] sm:$0xf]
    %v1777 = vld [vmem:[%s5 + $0x20] sm:$0xf]
    %v1778 = vld [vmem:[%s5 + $0x24] sm:$0xf]
    %v1779 = vld [vmem:[%s5 + $0x28] sm:$0xf]
    %v1780 = vld [vmem:[%s5 + $0x2c] sm:$0xf]
    %v1781 = vld [vmem:[%s5 + $0x30] sm:$0xf]
    %v1782 = vld [vmem:[%s5 + $0x34] sm:$0xf]
    %v1783 = vld [vmem:[%s5 + $0x38] sm:$0xf]
    %v1784 = vld [vmem:[%s5 + $0x3c] sm:$0xf]
    %v1785 = vld [vmem:[%s5 + $0x40] sm:$0xf]
    %v1786 = vld [vmem:[%s5 + $0x44] sm:$0xf]
    %v1787 = vld [vmem:[%s5 + $0x48] sm:$0xf]
    %v1788 = vld [vmem:[%s5 + $0x4c] sm:$0xf]
    %v1789 = vld [vmem:[%s5 + $0x50] sm:$0xf]
    %v1790 = vld [vmem:[%s5 + $0x54] sm:$0xf]
    %v1791 = vld [vmem:[%s5 + $0x58] sm:$0xf]
    %v1792 = vld [vmem:[%s5 + $0x5c] sm:$0xf]
    %v1793 = vld [vmem:[%s5 + $0x60] sm:$0xf]
    %v1794 = vld [vmem:[%s5 + $0x64] sm:$0xf]
    %v1795 = vld [vmem:[%s5 + $0x68] sm:$0xf]
    %v1796 = vld [vmem:[%s5 + $0x6c] sm:$0xf]
    %v1797 = vld [vmem:[%s5 + $0x70] sm:$0xf]
    %v1798 = vld [vmem:[%s5 + $0x74] sm:$0xf]
    %v1799 = vld [vmem:[%s5 + $0x78] sm:$0xf]
    %v1800 = vld [vmem:[%s5 + $0x7c] sm:$0xf]
    %v1801 = vld [vmem:[%s5 + $0x80] sm:$0xf]
    %v1802 = vld [vmem:[%s5 + $0x84] sm:$0xf]
    %v1803 = vld [vmem:[%s5 + $0x88] sm:$0xf]
    %v1804 = vld [vmem:[%s5 + $0x8c] sm:$0xf]
    %v1805 = vld [vmem:[%s5 + $0x90] sm:$0xf]
    %v1806 = vld [vmem:[%s5 + $0x94] sm:$0xf]
    %v1807 = vld [vmem:[%s5 + $0x98] sm:$0xf]
    %v1808 = vld [vmem:[%s5 + $0x9c] sm:$0xf]
    %v1809 = vld [vmem:[%s5 + $0xa0] sm:$0xf]
    %v1810 = vld [vmem:[%s5 + $0xa4] sm:$0xf]
    %v1811 = vld [vmem:[%s5 + $0xa8] sm:$0xf]
    %v1812 = vld [vmem:[%s5 + $0xac] sm:$0xf]
    %v1813 = vld [vmem:[%s5 + $0xb0] sm:$0xf]
    %v1814 = vld [vmem:[%s5 + $0xb4] sm:$0xf]
    %v1815 = vld [vmem:[%s5 + $0xb8] sm:$0xf]
    %v1816 = vld [vmem:[%s5 + $0xbc] sm:$0xf]
    %v1817 = vld [vmem:[%s5 + $0xc0] sm:$0xf]
    %v1818 = vld [vmem:[%s5 + $0xc4] sm:$0xf]
    %v1819 = vld [vmem:[%s5 + $0xc8] sm:$0xf]
    %v1820 = vld [vmem:[%s5 + $0xcc] sm:$0xf]
    %v1821 = vld [vmem:[%s5 + $0xd0] sm:$0xf]
    %v1822 = vld [vmem:[%s5 + $0xd4] sm:$0xf]
    %v1823 = vld [vmem:[%s5 + $0xd8] sm:$0xf]
    %v1824 = vld [vmem:[%s5 + $0xdc] sm:$0xf]
    %v1825 = vld [vmem:[%s5 + $0xe0] sm:$0xf]
    %v1826 = vld [vmem:[%s5 + $0xe4] sm:$0xf]
    %v1827 = vld [vmem:[%s5 + $0xe8] sm:$0xf]
    %v1828 = vld [vmem:[%s5 + $0xec] sm:$0xf]
    %v1829 = vld [vmem:[%s5 + $0xf0] sm:$0xf]
    %v1830 = vld [vmem:[%s5 + $0xf4] sm:$0xf]
    %v1831 = vld [vmem:[%s5 + $0xf8] sm:$0xf]
    %v1832 = vld [vmem:[%s5 + $0xfc] sm:$0xf]
    %v1833 = vld [vmem:[%s5 + $0x100] sm:$0xf]
    %v1834 = vld [vmem:[%s5 + $0x104] sm:$0xf]
    %v1835 = vld [vmem:[%s5 + $0x108] sm:$0xf]
    %v1836 = vld [vmem:[%s5 + $0x10c] sm:$0xf]
    %v1837 = vld [vmem:[%s5 + $0x110] sm:$0xf]
    %v1838 = vld [vmem:[%s5 + $0x114] sm:$0xf]
    %v1839 = vld [vmem:[%s5 + $0x118] sm:$0xf]
    %v1840 = vld [vmem:[%s5 + $0x11c] sm:$0xf]
    %v1841 = vld [vmem:[%s5 + $0x120] sm:$0xf]
    %v1842 = vld [vmem:[%s5 + $0x124] sm:$0xf]
    %v1843 = vld [vmem:[%s5 + $0x128] sm:$0xf]
    %v1844 = vld [vmem:[%s5 + $0x12c] sm:$0xf]
    %v1845 = vld [vmem:[%s5 + $0x130] sm:$0xf]
    %v1846 = vld [vmem:[%s5 + $0x134] sm:$0xf]
    %v1847 = vld [vmem:[%s5 + $0x138] sm:$0xf]
    %v1848 = vld [vmem:[%s5 + $0x13c] sm:$0xf]
    %v1849 = vld [vmem:[%s5 + $0x140] sm:$0xf]
    %v1850 = vld [vmem:[%s5 + $0x144] sm:$0xf]
    %v1851 = vld [vmem:[%s5 + $0x148] sm:$0xf]
    %v1852 = vld [vmem:[%s5 + $0x14c] sm:$0xf]
    %v1853 = vld [vmem:[%s5 + $0x150] sm:$0xf]
    %v1854 = vld [vmem:[%s5 + $0x154] sm:$0xf]
    %v1855 = vld [vmem:[%s5 + $0x158] sm:$0xf]
    %v1856 = vld [vmem:[%s5 + $0x15c] sm:$0xf]
    %v1857 = vld [vmem:[%s5 + $0x160] sm:$0xf]
    %v1858 = vld [vmem:[%s5 + $0x164] sm:$0xf]
    %v1859 = vld [vmem:[%s5 + $0x168] sm:$0xf]
    %v1860 = vld [vmem:[%s5 + $0x16c] sm:$0xf]
    %v1861 = vld [vmem:[%s5 + $0x170] sm:$0xf]
    %v1862 = vld [vmem:[%s5 + $0x174] sm:$0xf]
    %v1863 = vld [vmem:[%s5 + $0x178] sm:$0xf]
    %v1864 = vld [vmem:[%s5 + $0x17c] sm:$0xf]
    %v1865 = vld [vmem:[%s6] sm:$0x1]
    %v1867 = vlaneseq
    %v1868 = vshrl.u32 %v1867, 7
    %v1869 = vsub.s32 0, %v1868
    %v1870 = vrot.slane %v1865, %v1869
    %v1968 = vunpack.c.l.b16 %v1769
    %v1969 = vunpack.c.l.b16 %v1770
    %v1970 = vunpack.c.l.b16 %v1771
    %v1971 = vunpack.c.l.b16 %v1772
    %v1972 = vunpack.c.l.b16 %v1773
    %v1973 = vunpack.c.l.b16 %v1774
    %v1974 = vunpack.c.l.b16 %v1775
    %v1975 = vunpack.c.l.b16 %v1776
    %v1976 = vunpack.c.l.b16 %v1777
    %v1977 = vunpack.c.l.b16 %v1778
    %v1978 = vunpack.c.l.b16 %v1779
    %v1979 = vunpack.c.l.b16 %v1780
    %v1980 = vunpack.c.l.b16 %v1781
    %v1981 = vunpack.c.l.b16 %v1782
    %v1982 = vunpack.c.l.b16 %v1783
    %v1983 = vunpack.c.l.b16 %v1784
    %v1984 = vunpack.c.l.b16 %v1785
    %v1985 = vunpack.c.l.b16 %v1786
    %v1986 = vunpack.c.l.b16 %v1787
    %v1987 = vunpack.c.l.b16 %v1788
    %v1988 = vunpack.c.l.b16 %v1789
    %v1989 = vunpack.c.l.b16 %v1790
    %v1990 = vunpack.c.l.b16 %v1791
    %v1991 = vunpack.c.l.b16 %v1792
    %v1992 = vunpack.c.l.b16 %v1793
    %v1993 = vunpack.c.l.b16 %v1794
    %v1994 = vunpack.c.l.b16 %v1795
    %v1995 = vunpack.c.l.b16 %v1796
    %v1996 = vunpack.c.l.b16 %v1797
    %v1997 = vunpack.c.l.b16 %v1798
    %v1998 = vunpack.c.l.b16 %v1799
    %v1999 = vunpack.c.l.b16 %v1800
    %v2000 = vunpack.c.l.b16 %v1801
    %v2001 = vunpack.c.l.b16 %v1802
    %v2002 = vunpack.c.l.b16 %v1803
    %v2003 = vunpack.c.l.b16 %v1804
    %v2004 = vunpack.c.l.b16 %v1805
    %v2005 = vunpack.c.l.b16 %v1806
    %v2006 = vunpack.c.l.b16 %v1807
    %v2007 = vunpack.c.l.b16 %v1808
    %v2008 = vunpack.c.l.b16 %v1809
    %v2009 = vunpack.c.l.b16 %v1810
    %v2010 = vunpack.c.l.b16 %v1811
    %v2011 = vunpack.c.l.b16 %v1812
    %v2012 = vunpack.c.l.b16 %v1813
    %v2013 = vunpack.c.l.b16 %v1814
    %v2014 = vunpack.c.l.b16 %v1815
    %v2015 = vunpack.c.l.b16 %v1816
    %v2016 = vunpack.c.l.b16 %v1817
    %v2017 = vunpack.c.l.b16 %v1818
    %v2018 = vunpack.c.l.b16 %v1819
    %v2019 = vunpack.c.l.b16 %v1820
    %v2020 = vunpack.c.l.b16 %v1821
    %v2021 = vunpack.c.l.b16 %v1822
    %v2022 = vunpack.c.l.b16 %v1823
    %v2023 = vunpack.c.l.b16 %v1824
    %v2024 = vunpack.c.l.b16 %v1825
    %v2025 = vunpack.c.l.b16 %v1826
    %v2026 = vunpack.c.l.b16 %v1827
    %v2027 = vunpack.c.l.b16 %v1828
    %v2028 = vunpack.c.l.b16 %v1829
    %v2029 = vunpack.c.l.b16 %v1830
    %v2030 = vunpack.c.l.b16 %v1831
    %v2031 = vunpack.c.l.b16 %v1832
    %v2032 = vunpack.c.l.b16 %v1833
    %v2033 = vunpack.c.l.b16 %v1834
    %v2034 = vunpack.c.l.b16 %v1835
    %v2035 = vunpack.c.l.b16 %v1836
    %v2036 = vunpack.c.l.b16 %v1837
    %v2037 = vunpack.c.l.b16 %v1838
    %v2038 = vunpack.c.l.b16 %v1839
    %v2039 = vunpack.c.l.b16 %v1840
    %v2040 = vunpack.c.l.b16 %v1841
    %v2041 = vunpack.c.l.b16 %v1842
    %v2042 = vunpack.c.l.b16 %v1843
    %v2043 = vunpack.c.l.b16 %v1844
    %v2044 = vunpack.c.l.b16 %v1845
    %v2045 = vunpack.c.l.b16 %v1846
    %v2046 = vunpack.c.l.b16 %v1847
    %v2047 = vunpack.c.l.b16 %v1848
    %v2048 = vunpack.c.l.b16 %v1849
    %v2049 = vunpack.c.l.b16 %v1850
    %v2050 = vunpack.c.l.b16 %v1851
    %v2051 = vunpack.c.l.b16 %v1852
    %v2052 = vunpack.c.l.b16 %v1853
    %v2053 = vunpack.c.l.b16 %v1854
    %v2054 = vunpack.c.l.b16 %v1855
    %v2055 = vunpack.c.l.b16 %v1856
    %v2056 = vunpack.c.l.b16 %v1857
    %v2057 = vunpack.c.l.b16 %v1858
    %v2058 = vunpack.c.l.b16 %v1859
    %v2059 = vunpack.c.l.b16 %v1860
    %v2060 = vunpack.c.l.b16 %v1861
    %v2061 = vunpack.c.l.b16 %v1862
    %v2062 = vunpack.c.l.b16 %v1863
    %v2063 = vunpack.c.l.b16 %v1864
    %v2064 = vpack.c.b16 %v1969, %v1968
    %v2065 = vpack.c.b16 %v1971, %v1970
    %v2066 = vpack.c.b16 %v1973, %v1972
    %v2067 = vpack.c.b16 %v1975, %v1974
    %v2068 = vpack.c.b16 %v1977, %v1976
    %v2069 = vpack.c.b16 %v1979, %v1978
    %v2070 = vpack.c.b16 %v1981, %v1980
    %v2071 = vpack.c.b16 %v1983, %v1982
    %v2072 = vpack.c.b16 %v1985, %v1984
    %v2073 = vpack.c.b16 %v1987, %v1986
    %v2074 = vpack.c.b16 %v1989, %v1988
    %v2075 = vpack.c.b16 %v1991, %v1990
    %v2076 = vpack.c.b16 %v1993, %v1992
    %v2077 = vpack.c.b16 %v1995, %v1994
    %v2078 = vpack.c.b16 %v1997, %v1996
    %v2079 = vpack.c.b16 %v1999, %v1998
    %v2080 = vpack.c.b16 %v2001, %v2000
    %v2081 = vpack.c.b16 %v2003, %v2002
    %v2082 = vpack.c.b16 %v2005, %v2004
    %v2083 = vpack.c.b16 %v2007, %v2006
    %v2084 = vpack.c.b16 %v2009, %v2008
    %v2085 = vpack.c.b16 %v2011, %v2010
    %v2086 = vpack.c.b16 %v2013, %v2012
    %v2087 = vpack.c.b16 %v2015, %v2014
    %v2088 = vpack.c.b16 %v2017, %v2016
    %v2089 = vpack.c.b16 %v2019, %v2018
    %v2090 = vpack.c.b16 %v2021, %v2020
    %v2091 = vpack.c.b16 %v2023, %v2022
    %v2092 = vpack.c.b16 %v2025, %v2024
    %v2093 = vpack.c.b16 %v2027, %v2026
    %v2094 = vpack.c.b16 %v2029, %v2028
    %v2095 = vpack.c.b16 %v2031, %v2030
    %v2096 = vpack.c.b16 %v2033, %v2032
    %v2097 = vpack.c.b16 %v2035, %v2034
    %v2098 = vpack.c.b16 %v2037, %v2036
    %v2099 = vpack.c.b16 %v2039, %v2038
    %v2100 = vpack.c.b16 %v2041, %v2040
    %v2101 = vpack.c.b16 %v2043, %v2042
    %v2102 = vpack.c.b16 %v2045, %v2044
    %v2103 = vpack.c.b16 %v2047, %v2046
    %v2104 = vpack.c.b16 %v2049, %v2048
    %v2105 = vpack.c.b16 %v2051, %v2050
    %v2106 = vpack.c.b16 %v2053, %v2052
    %v2107 = vpack.c.b16 %v2055, %v2054
    %v2108 = vpack.c.b16 %v2057, %v2056
    %v2109 = vpack.c.b16 %v2059, %v2058
    %v2110 = vpack.c.b16 %v2061, %v2060
    %v2111 = vpack.c.b16 %v2063, %v2062
    %2160 = vmatprep.subr.bf16.mxu0 0
    %2161 = vmatpush1.bf16.msra.mxu0 %v2071
    %2162 = vmatprep.subr.bf16.mxu0 0
    %2163 = vmatpush1.bf16.msra.mxu0 %v2070
    %2164 = vmatprep.subr.bf16.mxu0 0
    %2165 = vmatpush1.bf16.msra.mxu0 %v2069
    %2166 = vmatprep.subr.bf16.mxu0 0
    %2167 = vmatpush1.bf16.msra.mxu0 %v2068
    %2168 = vmatprep.subr.bf16.mxu0 0
    %2169 = vmatpush1.bf16.msra.mxu0 %v2067
    %2170 = vmatprep.subr.bf16.mxu0 0
    %2171 = vmatpush1.bf16.msra.mxu0 %v2066
    %2172 = vmatprep.subr.bf16.mxu0 0
    %2173 = vmatpush1.bf16.msra.mxu0 %v2065
    %2174 = vmatprep.subr.bf16.mxu0 0
    %2175 = vmatpush1.bf16.msra.mxu0 %v2064
    %2176 = vmatprep.subr.bf16.mxu0 0
    %2177 = vmatpush2.bf16.msra.mxu0 %v2079
    %2178 = vmatprep.subr.bf16.mxu0 0
    %2179 = vmatpush2.bf16.msra.mxu0 %v2078
    %2180 = vmatprep.subr.bf16.mxu0 0
    %2181 = vmatpush2.bf16.msra.mxu0 %v2077
    %2182 = vmatprep.subr.bf16.mxu0 0
    %2183 = vmatpush2.bf16.msra.mxu0 %v2076
    %2184 = vmatprep.subr.bf16.mxu0 0
    %2185 = vmatpush2.bf16.msra.mxu0 %v2075
    %2186 = vmatprep.subr.bf16.mxu0 0
    %2187 = vmatpush2.bf16.msra.mxu0 %v2074
    %2188 = vmatprep.subr.bf16.mxu0 0
    %2189 = vmatpush2.bf16.msra.mxu0 %v2073
    %2190 = vmatprep.subr.bf16.mxu0 0
    %2191 = vmatpush2.bf16.msra.mxu0 %v2072
    %2192 = vmatprep.mubr.bf16.mxu0 %v1764
    %2193 = vmatmul.mubr.bf16.gmra.mxu0 %v1763
    %v2194 = vpop.f32.mrf.mxu0
    %v2195 = vadd.f32 %v1870, %v2194
    %v2196 = vpop.f32.mrf.mxu0
    %v2197 = vpop.f32.mrf.mxu0
    %v2198 = vadd.f32 %v1870, %v2197
    %v2199 = vpop.f32.mrf.mxu0
    %2200 = vdwg.mxu0
    %2201 = vmatprep.subr.bf16.mxu0 0
    %2202 = vmatpush1.bf16.msra.mxu0 %v2087
    %2203 = vmatprep.subr.bf16.mxu0 0
    %2204 = vmatpush1.bf16.msra.mxu0 %v2086
    %2205 = vmatprep.subr.bf16.mxu0 0
    %2206 = vmatpush1.bf16.msra.mxu0 %v2085
    %2207 = vmatprep.subr.bf16.mxu0 0
    %2208 = vmatpush1.bf16.msra.mxu0 %v2084
    %2209 = vmatprep.subr.bf16.mxu0 0
    %2210 = vmatpush1.bf16.msra.mxu0 %v2083
    %2211 = vmatprep.subr.bf16.mxu0 0
    %2212 = vmatpush1.bf16.msra.mxu0 %v2082
    %2213 = vmatprep.subr.bf16.mxu0 0
    %2214 = vmatpush1.bf16.msra.mxu0 %v2081
    %2215 = vmatprep.subr.bf16.mxu0 0
    %2216 = vmatpush1.bf16.msra.mxu0 %v2080
    %2217 = vmatprep.subr.bf16.mxu0 0
    %2218 = vmatpush2.bf16.msra.mxu0 %v2095
    %2219 = vmatprep.subr.bf16.mxu0 0
    %2220 = vmatpush2.bf16.msra.mxu0 %v2094
    %2221 = vmatprep.subr.bf16.mxu0 0
    %2222 = vmatpush2.bf16.msra.mxu0 %v2093
    %2223 = vmatprep.subr.bf16.mxu0 0
    %2224 = vmatpush2.bf16.msra.mxu0 %v2092
    %2225 = vmatprep.subr.bf16.mxu0 0
    %2226 = vmatpush2.bf16.msra.mxu0 %v2091
    %2227 = vmatprep.subr.bf16.mxu0 0
    %2228 = vmatpush2.bf16.msra.mxu0 %v2090
    %2229 = vmatprep.subr.bf16.mxu0 0
    %2230 = vmatpush2.bf16.msra.mxu0 %v2089
    %2231 = vmatprep.subr.bf16.mxu0 0
    %2232 = vmatpush2.bf16.msra.mxu0 %v2088
    %2233 = vmatprep.mubr.bf16.mxu0 %v1766
    %2234 = vmatmul.mubr.bf16.gmra.mxu0 %v1765
    %v2235 = vpop.f32.mrf.mxu0
    %v2236 = vadd.f32 %v2195, %v2235
    %v2237 = vpop.f32.mrf.mxu0
    %v2238 = vpop.f32.mrf.mxu0
    %v2239 = vadd.f32 %v2198, %v2238
    %v2240 = vpop.f32.mrf.mxu0
    %2241 = vdwg.mxu0
    %2242 = vmatprep.subr.bf16.mxu0 0
    %2243 = vmatpush1.bf16.msra.mxu0 %v2103
    %2244 = vmatprep.subr.bf16.mxu0 0
    %2245 = vmatpush1.bf16.msra.mxu0 %v2102
    %2246 = vmatprep.subr.bf16.mxu0 0
    %2247 = vmatpush1.bf16.msra.mxu0 %v2101
    %2248 = vmatprep.subr.bf16.mxu0 0
    %2249 = vmatpush1.bf16.msra.mxu0 %v2100
    %2250 = vmatprep.subr.bf16.mxu0 0
    %2251 = vmatpush1.bf16.msra.mxu0 %v2099
    %2252 = vmatprep.subr.bf16.mxu0 0
    %2253 = vmatpush1.bf16.msra.mxu0 %v2098
    %2254 = vmatprep.subr.bf16.mxu0 0
    %2255 = vmatpush1.bf16.msra.mxu0 %v2097
    %2256 = vmatprep.subr.bf16.mxu0 0
    %2257 = vmatpush1.bf16.msra.mxu0 %v2096
    %2258 = vmatprep.subr.bf16.mxu0 0
    %2259 = vmatpush2.bf16.msra.mxu0 %v2111
    %2260 = vmatprep.subr.bf16.mxu0 0
    %2261 = vmatpush2.bf16.msra.mxu0 %v2110
    %2262 = vmatprep.subr.bf16.mxu0 0
    %2263 = vmatpush2.bf16.msra.mxu0 %v2109
    %2264 = vmatprep.subr.bf16.mxu0 0
    %2265 = vmatpush2.bf16.msra.mxu0 %v2108
    %2266 = vmatprep.subr.bf16.mxu0 0
    %2267 = vmatpush2.bf16.msra.mxu0 %v2107
    %2268 = vmatprep.subr.bf16.mxu0 0
    %2269 = vmatpush2.bf16.msra.mxu0 %v2106
    %2270 = vmatprep.subr.bf16.mxu0 0
    %2271 = vmatpush2.bf16.msra.mxu0 %v2105
    %2272 = vmatprep.subr.bf16.mxu0 0
    %2273 = vmatpush2.bf16.msra.mxu0 %v2104
    %2274 = vmatprep.mubr.bf16.mxu0 %v1768
    %2275 = vmatmul.mubr.bf16.gmra.mxu0 %v1767
    %v2276 = vpop.f32.mrf.mxu0
    %v2277 = vadd.f32 %v2236, %v2276
    %v2278 = vpop.f32.mrf.mxu0
    %v2279 = vpop.f32.mrf.mxu0
    %v2280 = vadd.f32 %v2239, %v2279
    %v2281 = vpop.f32.mrf.mxu0
    %2282 = vdwg.mxu0
    %v2283 = vmax.f32 %v2277, 0.0
    %v2284 = vmax.f32 %v2280, 0.0
    %v2285 = vld [vmem:[%s7] sm:$0xff]
    %v2286 = vld [vmem:[%s7 + $0x8] sm:$0xff]
    %v2287 = vld [vmem:[%s7 + $0x10] sm:$0xff]
    %v2288 = vld [vmem:[%s7 + $0x18] sm:$0xff]
    %v2289 = vld [vmem:[%s7 + $0x20] sm:$0xff]
    %v2290 = vld [vmem:[%s7 + $0x28] sm:$0xff]
    %v2291 = vld [vmem:[%s7 + $0x30] sm:$0xff]
    %v2292 = vld [vmem:[%s7 + $0x38] sm:$0xff]
    %v2293 = vld [vmem:[%s8] sm:$0x1]
    %v2295 = vlaneseq
    %v2296 = vshrl.u32 %v2295, 7
    %v2297 = vsub.s32 0, %v2296
    %v2298 = vrot.slane %v2293, %v2297
    %vm2300 = vcmask 523264
    %v2302 = vsel %vm2300, %v2283, 0
    %v2305 = vsel %vm2300, %v2284, 0
    %2307 = vmatprep.subr.mxu0 0.0
    %2308 = vmatpush1.msra.mxu0 0.0
    %2309 = vmatprep.subr.mxu0 0.0
    %2310 = vmatpush1.msra.mxu0 0.0
    %2311 = vmatprep.subr.mxu0 0.0
    %2312 = vmatpush1.msra.mxu0 0.0
    %2313 = vmatprep.subr.mxu0 0.0
    %2314 = vmatpush1.msra.mxu0 0.0
    %2315 = vmatprep.subr.mxu0 0.0
    %2316 = vmatpush1.msra.mxu0 0.0
    %2317 = vmatprep.subr.mxu0 0.0
    %2318 = vmatpush1.msra.mxu0 0.0
    %2319 = vmatprep.subr.mxu0 0.0
    %2320 = vmatpush1.msra.mxu0 0.0
    %2321 = vmatprep.subr.mxu0 0.0
    %2322 = vmatpush1.msra.mxu0 0.0
    %2323 = vmatprep.subr.mxu0 0.0
    %2324 = vmatpush1.msra.mxu0 %v2292
    %2325 = vmatprep.subr.mxu0 0.0
    %2326 = vmatpush1.msra.mxu0 %v2291
    %2327 = vmatprep.subr.mxu0 0.0
    %2328 = vmatpush1.msra.mxu0 %v2290
    %2329 = vmatprep.subr.mxu0 0.0
    %2330 = vmatpush1.msra.mxu0 %v2289
    %2331 = vmatprep.subr.mxu0 0.0
    %2332 = vmatpush1.msra.mxu0 %v2288
    %2333 = vmatprep.subr.mxu0 0.0
    %2334 = vmatpush1.msra.mxu0 %v2287
    %2335 = vmatprep.subr.mxu0 0.0
    %2336 = vmatpush1.msra.mxu0 %v2286
    %2337 = vmatprep.subr.mxu0 0.0
    %2338 = vmatpush1.msra.mxu0 %v2285
    %2339 = vmatprep.subr.mxu0 0.0
    %2340 = vmatpush2.msra.mxu0 0.0
    %2341 = vmatprep.subr.mxu0 0.0
    %2342 = vmatpush2.msra.mxu0 0.0
    %2343 = vmatprep.subr.mxu0 0.0
    %2344 = vmatpush2.msra.mxu0 0.0
    %2345 = vmatprep.subr.mxu0 0.0
    %2346 = vmatpush2.msra.mxu0 0.0
    %2347 = vmatprep.subr.mxu0 0.0
    %2348 = vmatpush2.msra.mxu0 0.0
    %2349 = vmatprep.subr.mxu0 0.0
    %2350 = vmatpush2.msra.mxu0 0.0
    %2351 = vmatprep.subr.mxu0 0.0
    %2352 = vmatpush2.msra.mxu0 0.0
    %2353 = vmatprep.subr.mxu0 0.0
    %2354 = vmatpush2.msra.mxu0 0.0
    %2355 = vmatprep.subr.mxu0 0.0
    %2356 = vmatpush2.msra.mxu0 0.0
    %2357 = vmatprep.subr.mxu0 0.0
    %2358 = vmatpush2.msra.mxu0 0.0
    %2359 = vmatprep.subr.mxu0 0.0
    %2360 = vmatpush2.msra.mxu0 0.0
    %2361 = vmatprep.subr.mxu0 0.0
    %2362 = vmatpush2.msra.mxu0 0.0
    %2363 = vmatprep.subr.mxu0 0.0
    %2364 = vmatpush2.msra.mxu0 0.0
    %2365 = vmatprep.subr.mxu0 0.0
    %2366 = vmatpush2.msra.mxu0 0.0
    %2367 = vmatprep.subr.mxu0 0.0
    %2368 = vmatpush2.msra.mxu0 0.0
    %2369 = vmatprep.subr.mxu0 0.0
    %2370 = vmatpush2.msra.mxu0 0.0
    %2371 = vmatprep.mubr.f32.mxu0 0.0
    %2372 = vmatmul.mubr.f32.gmra.mxu0 %v2302
    %v2373 = vpop.f32.mrf.mxu0
    %v2374 = vadd.f32 %v2298, %v2373
    %v2375 = vpop.f32.mrf.mxu0
    %2376 = vmatprep.mubr.f32.mxu0 0.0
    %2377 = vmatmul.mubr.f32.gmra.mxu0 %v2305
    %v2378 = vpop.f32.mrf.mxu0
    %v2379 = vadd.f32 %v2298, %v2378
    %v2380 = vpop.f32.mrf.mxu0
    %2381 = vdwg.mxu0
    %vm2382 = vcmask 80896
    %2383 = vst.msk [vmem:[#allocation2] sm:$0xff] %vm2382, %v2374
    %2384 = vst.msk [vmem:[#allocation2 + $0x8] sm:$0xff] %vm2382, %v2379
    // Predicated region
    $region38: #{tpu_custom_call.1} parent=1 // pred_check
      _
    $region39: #{tpu_custom_call.1} parent=1 // pred_check_branch
      %2386 = sbr.rel (0) target = $region41
    $region40: #{tpu_custom_call.1} parent=1 // pred_region
      %s2388 = ssub.s32 256, 256
      %2389 = vsyncadd [#allocation3], %s2388
      %s2390 = sshll.u32 [#allocation2], 4
      %s2391 = int_to_ptr.vmem [resolvable:$true] %s2390
      %2396 = dma.vmem_to_hbm [thread:$0]  %s2391, 256, %s9, [#allocation3], 128, 128, 8
    $region41: #{tpu_custom_call.1} parent=1 // pred_fallthru
      _
    // Predicated region
    $region42: #{tpu_custom_call.1} parent=1 // pred_check
      _
    $region43: #{tpu_custom_call.1} parent=1 // pred_check_branch
      %2398 = sbr.rel (0) target = $region45
    $region44: #{tpu_custom_call.1} parent=1 // pred_region
      %2399 = dma.done [#allocation3], 256
    $region45: #{tpu_custom_call.1} parent=1 // pred_fallthru
      _
    %2400 = vsyncpa [#allocation3], 1

</llo_original>
